<compile_context>
chip_gen: v6e
topology: v6e:2x2x1
jax: 0.10.0
libtpu: 0.0.40
codegen_flags: <defaults>
</compile_context>

<pallas_src>
import math
import functools

import jax
import jax.numpy as jnp
from jax.experimental import pallas as pl
from jax.experimental.pallas import tpu as pltpu


_VMEM_LIMIT = 48 * 1024 * 1024   # safe on v5e/v6e (128 MiB phys) and v7x (64 MiB)


# ----------------------------- in-kernel helpers -----------------------------

def _layer_norm(x, gamma, beta, eps=1e-5):
    mu = jnp.mean(x, axis=-1, keepdims=True)
    var = jnp.mean((x - mu) ** 2, axis=-1, keepdims=True)
    return (x - mu) * jax.lax.rsqrt(var + eps) * gamma + beta


# --------------------------- transformer block kernel -------------------------

def transformer_block_kernel(n_heads, d_k,
                             x_ref, mask_ref,
                             wq_ref, bq_ref, wk_ref, bk_ref, wv_ref, bv_ref,
                             wo_ref, bo_ref,
                             g1_ref, be1_ref,
                             w1_ref, b1_ref, w2_ref, b2_ref,
                             g2_ref, be2_ref,
                             out_ref,
                             hv_scratch):
    x = x_ref[0]                     # (T, D) fp32
    pad = mask_ref[0]                # (1, T) fp32, 1.0 = keep
    T = x.shape[0]

    x_bf = x.astype(jnp.bfloat16)

    # QKV projections: bf16 operands, fp32 accumulation on the MXU.
    q = jnp.dot(x_bf, wq_ref[...], preferred_element_type=jnp.float32) + bq_ref[...]
    k = jnp.dot(x_bf, wk_ref[...], preferred_element_type=jnp.float32) + bk_ref[...]
    v = jnp.dot(x_bf, wv_ref[...], preferred_element_type=jnp.float32) + bv_ref[...]
    q = q.astype(jnp.bfloat16)
    k = k.astype(jnp.bfloat16)
    v = v.astype(jnp.bfloat16)

    # One additive causal+padding mask, hoisted out of the per-head loop.
    row = jax.lax.broadcasted_iota(jnp.int32, (T, T), 0)
    col = jax.lax.broadcasted_iota(jnp.int32, (T, T), 1)
    keep = jnp.logical_and(col <= row, pad > 0.0)                    # (T, T)
    bias = jnp.where(keep, 0.0, -1e30).astype(jnp.float32)

    scale = jnp.float32(1.0 / math.sqrt(d_k))

    # Per-head attention; normalized head outputs are gathered into one
    # (T, n_heads*d_k) buffer so Wo is applied as a single full-K matmul.
    for h in range(n_heads):
        lo, hi = h * d_k, (h + 1) * d_k
        qh = q[:, lo:hi]
        kh = k[:, lo:hi]
        vh = v[:, lo:hi]
        s = jnp.dot(qh, kh.T, preferred_element_type=jnp.float32) * scale + bias
        s = s - jnp.max(s, axis=-1, keepdims=True)
        p = jnp.exp(s)
        inv_l = pl.reciprocal(jnp.sum(p, axis=-1, keepdims=True), approx=True)
        hv = jnp.dot(p.astype(jnp.bfloat16), vh,
                     preferred_element_type=jnp.float32)             # (T, d_k)
        hv_scratch[:, lo:hi] = hv * inv_l

    hv_all = hv_scratch[...].astype(jnp.bfloat16)                    # (T, proj)
    attn_out = jnp.dot(hv_all, wo_ref[...],
                       preferred_element_type=jnp.float32) + bo_ref[...]

    # post-LN residual block 1
    h1 = _layer_norm(x + attn_out, g1_ref[...], be1_ref[...])

    # feed-forward (GELU, tanh approximation), bf16 matmuls
    f = jnp.dot(h1.astype(jnp.bfloat16), w1_ref[...],
                preferred_element_type=jnp.float32) + b1_ref[...]
    f = jax.nn.gelu(f, approximate=True)
    f = jnp.dot(f.astype(jnp.bfloat16), w2_ref[...],
                preferred_element_type=jnp.float32) + b2_ref[...]

    # post-LN residual block 2 (dropout is a no-op at inference)
    h2 = _layer_norm(h1 + f, g2_ref[...], be2_ref[...])
    out_ref[0] = h2.astype(out_ref.dtype)


def run_transformer_block(x, pad_mask3, lp, n_heads, d_k):
    B, T, D = x.shape
    proj = n_heads * d_k
    weights = [lp["wq"], lp["bq"], lp["wk"], lp["bk"], lp["wv"], lp["bv"],
               lp["wo"], lp["bo"], lp["g1"], lp["be1"],
               lp["w1"], lp["b1"], lp["w2"], lp["b2"], lp["g2"], lp["be2"]]

    in_specs = [
        pl.BlockSpec((1, T, D), lambda b: (b, 0, 0)),    # x
        pl.BlockSpec((1, 1, T), lambda b: (b, 0, 0)),    # pad mask
    ] + [pl.BlockSpec(w.shape, lambda b: (0, 0)) for w in weights]

    kernel = functools.partial(transformer_block_kernel, n_heads, d_k)
    return pl.pallas_call(
        kernel,
        out_shape=jax.ShapeDtypeStruct((B, T, D), jnp.float32),
        grid=(B,),
        in_specs=in_specs,
        out_specs=pl.BlockSpec((1, T, D), lambda b: (b, 0, 0)),
        scratch_shapes=[pltpu.VMEM((T, proj), jnp.float32)],
        compiler_params=pltpu.CompilerParams(
            dimension_semantics=("parallel",),
            vmem_limit_bytes=_VMEM_LIMIT),
    )(x, pad_mask3, *weights)


# ----------------------------- final LN + fc kernel ---------------------------

def head_kernel(x_ref, g_ref, be_ref, wf_ref, bf_ref, out_ref):
    x = x_ref[0]                                                     # (T, D)
    xn = _layer_norm(x, g_ref[...], be_ref[...])
    logits = jnp.dot(xn.astype(jnp.bfloat16), wf_ref[...],
                     preferred_element_type=jnp.float32) + bf_ref[...]
    out_ref[0] = logits.astype(out_ref.dtype)


def run_head(x, g, be, wf, bf, tv=2048):
    B, T, D = x.shape
    V = wf.shape[1]
    # Tile the vocab dim with lane-dense multiple-of-128 tiles when possible;
    # fall back to the full (small) vocab otherwise.
    TV = tv if (V % tv == 0) else V
    nv = V // TV

    in_specs = [
        pl.BlockSpec((1, T, D), lambda b, j: (b, 0, 0)),
        pl.BlockSpec(g.shape, lambda b, j: (0, 0)),
        pl.BlockSpec(be.shape, lambda b, j: (0, 0)),
        pl.BlockSpec((D, TV), lambda b, j: (0, j)),
        pl.BlockSpec((1, TV), lambda b, j: (0, j)),
    ]
    return pl.pallas_call(
        head_kernel,
        out_shape=jax.ShapeDtypeStruct((B, T, V), jnp.float32),
        grid=(B, nv),
        in_specs=in_specs,
        out_specs=pl.BlockSpec((1, T, TV), lambda b, j: (b, 0, j)),
        compiler_params=pltpu.CompilerParams(
            dimension_semantics=("parallel", "parallel"),
            vmem_limit_bytes=_VMEM_LIMIT),
    )(x, g, be, wf, bf)


# ------------------------------- full decoder --------------------------------

def sinusoidal_pe(max_len, d_model):
    pos = jnp.arange(max_len, dtype=jnp.float32)[:, None]
    i = jnp.arange(0, d_model, 2, dtype=jnp.float32)
    div = jnp.exp(-math.log(10000.0) * i / d_model)
    pe = jnp.zeros((max_len, d_model), jnp.float32)
    pe = pe.at[:, 0::2].set(jnp.sin(pos * div))
    pe = pe.at[:, 1::2].set(jnp.cos(pos * div))
    return pe


def init_params(key, vocab_size, max_len, d_k, d_model, n_heads, n_layers, d_ff):
    proj = d_k * n_heads
    keys = jax.random.split(key, 2 + 8 * n_layers)
    ki = iter(keys)
    # MXU matmul weights stored in bf16 (halves HBM/VMEM traffic, 4x MXU rate);
    # biases / LN params stay fp32.
    wgt = lambda k, shp: (0.02 * jax.random.normal(k, shp)).astype(jnp.bfloat16)

    params = {
        "emb": (0.02 * jax.random.normal(next(ki), (vocab_size, d_model))).astype(jnp.float32),
        "pe": sinusoidal_pe(max_len, d_model),
        "blocks": [],
        "g": jnp.ones((1, d_model), jnp.float32),
        "be": jnp.zeros((1, d_model), jnp.float32),
        "wf": wgt(next(ki), (d_model, vocab_size)),
        "bf": jnp.zeros((1, vocab_size), jnp.float32),
    }
    for _ in range(n_layers):
        lp = {
            "wq": wgt(next(ki), (d_model, proj)), "bq": jnp.zeros((1, proj), jnp.float32),
            "wk": wgt(next(ki), (d_model, proj)), "bk": jnp.zeros((1, proj), jnp.float32),
            "wv": wgt(next(ki), (d_model, proj)), "bv": jnp.zeros((1, proj), jnp.float32),
            "wo": wgt(next(ki), (proj, d_model)), "bo": jnp.zeros((1, d_model), jnp.float32),
            "g1": jnp.ones((1, d_model), jnp.float32), "be1": jnp.zeros((1, d_model), jnp.float32),
            "w1": wgt(next(ki), (d_model, d_ff)), "b1": jnp.zeros((1, d_ff), jnp.float32),
            "w2": wgt(next(ki), (d_ff, d_model)), "b2": jnp.zeros((1, d_model), jnp.float32),
            "g2": jnp.ones((1, d_model), jnp.float32), "be2": jnp.zeros((1, d_model), jnp.float32),
        }
        params["blocks"].append(lp)
    return params


def decoder_forward_pallas(ids, pad_mask, params, n_heads, d_k):
    B, T = ids.shape
    # glue: embedding gather + positional encoding add (dropout is a no-op)
    x = params["emb"][ids] + params["pe"][None, :T, :]
    pad3 = pad_mask.astype(jnp.float32)[:, None, :]          # (B, 1, T)
    for lp in params["blocks"]:
        x = run_transformer_block(x, pad3, lp, n_heads, d_k)
    return run_head(x, params["g"], params["be"], params["wf"], params["bf"])


# ------------------------------ pure-JAX reference ----------------------------

def decoder_forward_ref(ids, pad_mask, params, n_heads, d_k):
    # fp32 reference (weights are the same bf16-rounded values, math in fp32)
    f32 = lambda a: a.astype(jnp.float32)
    B, T = ids.shape
    x = params["emb"][ids] + params["pe"][None, :T, :]
    causal = jnp.tril(jnp.ones((T, T), bool))
    keep = causal[None, None] & (pad_mask[:, None, None, :] > 0)       # (B,1,T,T)
    for lp in params["blocks"]:
        q = x @ f32(lp["wq"]) + lp["bq"]
        k = x @ f32(lp["wk"]) + lp["bk"]
        v = x @ f32(lp["wv"]) + lp["bv"]
        rs = lambda t: t.reshape(B, T, n_heads, d_k).transpose(0, 2, 1, 3)
        qh, kh, vh = rs(q), rs(k), rs(v)
        s = jnp.einsum("bhqd,bhkd->bhqk", qh, kh) / math.sqrt(d_k)
        s = jnp.where(keep, s, -1e30)
        p = jax.nn.softmax(s, axis=-1)
        o = jnp.einsum("bhqk,bhkd->bhqd", p, vh).transpose(0, 2, 1, 3).reshape(B, T, -1)
        attn = o @ f32(lp["wo"]) + lp["bo"]
        h1 = _layer_norm(x + attn, lp["g1"], lp["be1"])
        f = jax.nn.gelu(h1 @ f32(lp["w1"]) + lp["b1"], approximate=True)
        f = f @ f32(lp["w2"]) + lp["b2"]
        x = _layer_norm(h1 + f, lp["g2"], lp["be2"])
    xn = _layer_norm(x, params["g"], params["be"])
    return xn @ f32(params["wf"]) + params["bf"]


# ----------------------------------- driver -----------------------------------

if __name__ == "__main__":
    vocab_size, max_len = 64, 8
    d_model, n_heads, d_k = 32, 4, 8
    n_layers, d_ff = 2, 4 * d_model
    B, T = 2, 8

    key = jax.random.PRNGKey(0)
    kp, kx = jax.random.split(key)
    params = init_params(kp, vocab_size, max_len, d_k, d_model, n_heads, n_layers, d_ff)

    ids = jax.random.randint(kx, (B, T), 0, vocab_size, dtype=jnp.int32)
    pad_mask = jnp.ones((B, T), jnp.float32)

    logits = decoder_forward_pallas(ids, pad_mask, params, n_heads, d_k)
    logits = jax.block_until_ready(logits)

    ref = decoder_forward_ref(ids, pad_mask, params, n_heads, d_k)
    assert logits.shape == (B, T, vocab_size)
    assert bool(jnp.all(jnp.isfinite(logits)))
    assert bool(jnp.allclose(logits, ref, atol=2e-2, rtol=2e-2))
    print("KERNEL_OK")
</pallas_src>

<mosaic_0001>
module attributes {stable_mosaic.version = 11 : i64} {
  func.func @transformer_block_kernel(%arg0: i32, %arg1: memref<1x8x32xf32, #tpu.memory_space<vmem>>, %arg2: memref<1x1x8xf32, #tpu.memory_space<vmem>>, %arg3: memref<32x32xbf16, #tpu.memory_space<vmem>>, %arg4: memref<1x32xf32, #tpu.memory_space<vmem>>, %arg5: memref<32x32xbf16, #tpu.memory_space<vmem>>, %arg6: memref<1x32xf32, #tpu.memory_space<vmem>>, %arg7: memref<32x32xbf16, #tpu.memory_space<vmem>>, %arg8: memref<1x32xf32, #tpu.memory_space<vmem>>, %arg9: memref<32x32xbf16, #tpu.memory_space<vmem>>, %arg10: memref<1x32xf32, #tpu.memory_space<vmem>>, %arg11: memref<1x32xf32, #tpu.memory_space<vmem>>, %arg12: memref<1x32xf32, #tpu.memory_space<vmem>>, %arg13: memref<32x128xbf16, #tpu.memory_space<vmem>>, %arg14: memref<1x128xf32, #tpu.memory_space<vmem>>, %arg15: memref<128x32xbf16, #tpu.memory_space<vmem>>, %arg16: memref<1x32xf32, #tpu.memory_space<vmem>>, %arg17: memref<1x32xf32, #tpu.memory_space<vmem>>, %arg18: memref<1x32xf32, #tpu.memory_space<vmem>>, %arg19: memref<1x8x32xf32, #tpu.memory_space<vmem>>, %arg20: memref<8x32xf32, #tpu.memory_space<vmem>>) attributes {dimension_semantics = [#tpu.dimension_semantics<parallel>], iteration_bounds = array<i64: 2>, scalar_prefetch = 0 : i64, scratch_operands = 1 : i64, tpu.core_type = #tpu.core_type<tc>, window_params = [{transform_indices = @transform_0, window_bounds = array<i64: 1, 8, 32>}, {transform_indices = @transform_1, window_bounds = array<i64: 1, 1, 8>}, {pipeline_mode = #tpu.pipeline_mode<synchronous>, transform_indices = @transform_2, window_bounds = array<i64: 32, 32>}, {pipeline_mode = #tpu.pipeline_mode<synchronous>, transform_indices = @transform_3, window_bounds = array<i64: 1, 32>}, {pipeline_mode = #tpu.pipeline_mode<synchronous>, transform_indices = @transform_4, window_bounds = array<i64: 32, 32>}, {pipeline_mode = #tpu.pipeline_mode<synchronous>, transform_indices = @transform_5, window_bounds = array<i64: 1, 32>}, {pipeline_mode = #tpu.pipeline_mode<synchronous>, transform_indices = @transform_6, window_bounds = array<i64: 32, 32>}, {pipeline_mode = #tpu.pipeline_mode<synchronous>, transform_indices = @transform_7, window_bounds = array<i64: 1, 32>}, {pipeline_mode = #tpu.pipeline_mode<synchronous>, transform_indices = @transform_8, window_bounds = array<i64: 32, 32>}, {pipeline_mode = #tpu.pipeline_mode<synchronous>, transform_indices = @transform_9, window_bounds = array<i64: 1, 32>}, {pipeline_mode = #tpu.pipeline_mode<synchronous>, transform_indices = @transform_10, window_bounds = array<i64: 1, 32>}, {pipeline_mode = #tpu.pipeline_mode<synchronous>, transform_indices = @transform_11, window_bounds = array<i64: 1, 32>}, {pipeline_mode = #tpu.pipeline_mode<synchronous>, transform_indices = @transform_12, window_bounds = array<i64: 32, 128>}, {pipeline_mode = #tpu.pipeline_mode<synchronous>, transform_indices = @transform_13, window_bounds = array<i64: 1, 128>}, {pipeline_mode = #tpu.pipeline_mode<synchronous>, transform_indices = @transform_14, window_bounds = array<i64: 128, 32>}, {pipeline_mode = #tpu.pipeline_mode<synchronous>, transform_indices = @transform_15, window_bounds = array<i64: 1, 32>}, {pipeline_mode = #tpu.pipeline_mode<synchronous>, transform_indices = @transform_16, window_bounds = array<i64: 1, 32>}, {pipeline_mode = #tpu.pipeline_mode<synchronous>, transform_indices = @transform_17, window_bounds = array<i64: 1, 32>}, {transform_indices = @transform_18, window_bounds = array<i64: 1, 8, 32>}]} {
    %c0 = arith.constant 0 : index
    %c0_0 = arith.constant 0 : index
    %c0_1 = arith.constant 0 : index
    %0 = vector.load %arg1[%c0, %c0_0, %c0_1] : memref<1x8x32xf32, #tpu.memory_space<vmem>>, vector<1x8x32xf32>
    %1 = vector.shape_cast %0 : vector<1x8x32xf32> to vector<8x32xf32>
    %c0_2 = arith.constant 0 : index
    %c0_3 = arith.constant 0 : index
    %c0_4 = arith.constant 0 : index
    %2 = vector.load %arg2[%c0_2, %c0_3, %c0_4] : memref<1x1x8xf32, #tpu.memory_space<vmem>>, vector<1x1x8xf32>
    %3 = vector.shape_cast %2 : vector<1x1x8xf32> to vector<1x8xf32>
    %4 = arith.truncf %1 : vector<8x32xf32> to vector<8x32xbf16>
    %c0_5 = arith.constant 0 : index
    %c0_6 = arith.constant 0 : index
    %5 = vector.load %arg3[%c0_5, %c0_6] : memref<32x32xbf16, #tpu.memory_space<vmem>>, vector<32x32xbf16>
    %cst = arith.constant dense<0.000000e+00> : vector<8x32xf32>
    %6 = tpu.matmul %4, %5, %cst {dimension_numbers = #tpu.dot_dimension_numbers<[1], [0], [0], [1], [0, 0, 1, 1], [], []>} : vector<8x32xbf16>, vector<32x32xbf16>, vector<8x32xf32> -> vector<8x32xf32>
    %c0_7 = arith.constant 0 : index
    %c0_8 = arith.constant 0 : index
    %7 = vector.load %arg4[%c0_7, %c0_8] : memref<1x32xf32, #tpu.memory_space<vmem>>, vector<1x32xf32>
    %8 = vector.broadcast %7 : vector<1x32xf32> to vector<8x32xf32>
    %9 = arith.addf %6, %8 : vector<8x32xf32>
    %c0_9 = arith.constant 0 : index
    %c0_10 = arith.constant 0 : index
    %10 = vector.load %arg5[%c0_9, %c0_10] : memref<32x32xbf16, #tpu.memory_space<vmem>>, vector<32x32xbf16>
    %cst_11 = arith.constant dense<0.000000e+00> : vector<8x32xf32>
    %11 = tpu.matmul %4, %10, %cst_11 {dimension_numbers = #tpu.dot_dimension_numbers<[1], [0], [0], [1], [0, 0, 1, 1], [], []>} : vector<8x32xbf16>, vector<32x32xbf16>, vector<8x32xf32> -> vector<8x32xf32>
    %c0_12 = arith.constant 0 : index
    %c0_13 = arith.constant 0 : index
    %12 = vector.load %arg6[%c0_12, %c0_13] : memref<1x32xf32, #tpu.memory_space<vmem>>, vector<1x32xf32>
    %13 = vector.broadcast %12 : vector<1x32xf32> to vector<8x32xf32>
    %14 = arith.addf %11, %13 : vector<8x32xf32>
    %c0_14 = arith.constant 0 : index
    %c0_15 = arith.constant 0 : index
    %15 = vector.load %arg7[%c0_14, %c0_15] : memref<32x32xbf16, #tpu.memory_space<vmem>>, vector<32x32xbf16>
    %cst_16 = arith.constant dense<0.000000e+00> : vector<8x32xf32>
    %16 = tpu.matmul %4, %15, %cst_16 {dimension_numbers = #tpu.dot_dimension_numbers<[1], [0], [0], [1], [0, 0, 1, 1], [], []>} : vector<8x32xbf16>, vector<32x32xbf16>, vector<8x32xf32> -> vector<8x32xf32>
    %c0_17 = arith.constant 0 : index
    %c0_18 = arith.constant 0 : index
    %17 = vector.load %arg8[%c0_17, %c0_18] : memref<1x32xf32, #tpu.memory_space<vmem>>, vector<1x32xf32>
    %18 = vector.broadcast %17 : vector<1x32xf32> to vector<8x32xf32>
    %19 = arith.addf %16, %18 : vector<8x32xf32>
    %20 = arith.truncf %9 : vector<8x32xf32> to vector<8x32xbf16>
    %21 = arith.truncf %14 : vector<8x32xf32> to vector<8x32xbf16>
    %22 = arith.truncf %19 : vector<8x32xf32> to vector<8x32xbf16>
    %23 = tpu.iota {dimensions = array<i32: 0>} : vector<8x8xi32>
    %24 = tpu.iota {dimensions = array<i32: 1>} : vector<8x8xi32>
    %25 = arith.cmpi sle, %24, %23 : vector<8x8xi32>
    %cst_19 = arith.constant 0.000000e+00 : f32
    %26 = vector.broadcast %cst_19 : f32 to vector<1x8xf32>
    %27 = arith.cmpf ogt, %3, %26 : vector<1x8xf32>
    %28 = vector.broadcast %27 : vector<1x8xi1> to vector<8x8xi1>
    %29 = arith.andi %25, %28 : vector<8x8xi1>
    %cst_20 = arith.constant 0.000000e+00 : f32
    %cst_21 = arith.constant -1.000000e+30 : f32
    %30 = vector.broadcast %cst_20 : f32 to vector<8x8xf32>
    %31 = vector.broadcast %cst_21 : f32 to vector<8x8xf32>
    %32 = arith.select %29, %30, %31 : vector<8x8xi1>, vector<8x8xf32>
    %33 = vector.extract_strided_slice %20 {offsets = [0, 0], sizes = [8, 8], strides = [1, 1]} : vector<8x32xbf16> to vector<8x8xbf16>
    %34 = vector.extract_strided_slice %21 {offsets = [0, 0], sizes = [8, 8], strides = [1, 1]} : vector<8x32xbf16> to vector<8x8xbf16>
    %35 = vector.extract_strided_slice %22 {offsets = [0, 0], sizes = [8, 8], strides = [1, 1]} : vector<8x32xbf16> to vector<8x8xbf16>
    %36 = tpu.transpose %34, [1, 0] : vector<8x8xbf16> -> vector<8x8xbf16>
    %cst_22 = arith.constant dense<0.000000e+00> : vector<8x8xf32>
    %37 = tpu.matmul %33, %36, %cst_22 {dimension_numbers = #tpu.dot_dimension_numbers<[1], [0], [0], [1], [0, 0, 1, 1], [], []>} : vector<8x8xbf16>, vector<8x8xbf16>, vector<8x8xf32> -> vector<8x8xf32>
    %cst_23 = arith.constant 0.353553385 : f32
    %38 = vector.broadcast %cst_23 : f32 to vector<8x8xf32>
    %39 = arith.mulf %37, %38 : vector<8x8xf32>
    %40 = arith.addf %39, %32 : vector<8x8xf32>
    %cst_24 = arith.constant dense<0xFF800000> : vector<8xf32>
    %41 = vector.multi_reduction <maximumf>, %40, %cst_24 [1] : vector<8x8xf32> to vector<8xf32>
    %42 = vector.shape_cast %41 : vector<8xf32> to vector<8x1xf32>
    %43 = vector.broadcast %42 : vector<8x1xf32> to vector<8x8xf32>
    %44 = arith.subf %40, %43 : vector<8x8xf32>
    %45 = math.exp %44 : vector<8x8xf32>
    %cst_25 = arith.constant dense<0.000000e+00> : vector<8xf32>
    %46 = vector.multi_reduction <add>, %45, %cst_25 [1] : vector<8x8xf32> to vector<8xf32>
    %47 = vector.shape_cast %46 : vector<8xf32> to vector<8x1xf32>
    %48 = tpu.reciprocal %47 {approx = true} : vector<8x1xf32> -> vector<8x1xf32>
    %49 = arith.truncf %45 : vector<8x8xf32> to vector<8x8xbf16>
    %cst_26 = arith.constant dense<0.000000e+00> : vector<8x8xf32>
    %50 = tpu.matmul %49, %35, %cst_26 {dimension_numbers = #tpu.dot_dimension_numbers<[1], [0], [0], [1], [0, 0, 1, 1], [], []>} : vector<8x8xbf16>, vector<8x8xbf16>, vector<8x8xf32> -> vector<8x8xf32>
    %51 = vector.broadcast %48 : vector<8x1xf32> to vector<8x8xf32>
    %52 = arith.mulf %50, %51 : vector<8x8xf32>
    %c0_27 = arith.constant 0 : index
    %c0_28 = arith.constant 0 : index
    %53 = vector.load %arg20[%c0_27, %c0_28] : memref<8x32xf32, #tpu.memory_space<vmem>>, vector<8x8xf32>
    tpu.vector_store %arg20[%c0_27, %c0_28], %52 {strides = array<i32>} : memref<8x32xf32, #tpu.memory_space<vmem>>, vector<8x8xf32>,
    %54 = vector.extract_strided_slice %20 {offsets = [0, 8], sizes = [8, 8], strides = [1, 1]} : vector<8x32xbf16> to vector<8x8xbf16>
    %55 = vector.extract_strided_slice %21 {offsets = [0, 8], sizes = [8, 8], strides = [1, 1]} : vector<8x32xbf16> to vector<8x8xbf16>
    %56 = vector.extract_strided_slice %22 {offsets = [0, 8], sizes = [8, 8], strides = [1, 1]} : vector<8x32xbf16> to vector<8x8xbf16>
    %57 = tpu.transpose %55, [1, 0] : vector<8x8xbf16> -> vector<8x8xbf16>
    %cst_29 = arith.constant dense<0.000000e+00> : vector<8x8xf32>
    %58 = tpu.matmul %54, %57, %cst_29 {dimension_numbers = #tpu.dot_dimension_numbers<[1], [0], [0], [1], [0, 0, 1, 1], [], []>} : vector<8x8xbf16>, vector<8x8xbf16>, vector<8x8xf32> -> vector<8x8xf32>
    %cst_30 = arith.constant 0.353553385 : f32
    %59 = vector.broadcast %cst_30 : f32 to vector<8x8xf32>
    %60 = arith.mulf %58, %59 : vector<8x8xf32>
    %61 = arith.addf %60, %32 : vector<8x8xf32>
    %cst_31 = arith.constant dense<0xFF800000> : vector<8xf32>
    %62 = vector.multi_reduction <maximumf>, %61, %cst_31 [1] : vector<8x8xf32> to vector<8xf32>
    %63 = vector.shape_cast %62 : vector<8xf32> to vector<8x1xf32>
    %64 = vector.broadcast %63 : vector<8x1xf32> to vector<8x8xf32>
    %65 = arith.subf %61, %64 : vector<8x8xf32>
    %66 = math.exp %65 : vector<8x8xf32>
    %cst_32 = arith.constant dense<0.000000e+00> : vector<8xf32>
    %67 = vector.multi_reduction <add>, %66, %cst_32 [1] : vector<8x8xf32> to vector<8xf32>
    %68 = vector.shape_cast %67 : vector<8xf32> to vector<8x1xf32>
    %69 = tpu.reciprocal %68 {approx = true} : vector<8x1xf32> -> vector<8x1xf32>
    %70 = arith.truncf %66 : vector<8x8xf32> to vector<8x8xbf16>
    %cst_33 = arith.constant dense<0.000000e+00> : vector<8x8xf32>
    %71 = tpu.matmul %70, %56, %cst_33 {dimension_numbers = #tpu.dot_dimension_numbers<[1], [0], [0], [1], [0, 0, 1, 1], [], []>} : vector<8x8xbf16>, vector<8x8xbf16>, vector<8x8xf32> -> vector<8x8xf32>
    %72 = vector.broadcast %69 : vector<8x1xf32> to vector<8x8xf32>
    %73 = arith.mulf %71, %72 : vector<8x8xf32>
    %c0_34 = arith.constant 0 : index
    %c8 = arith.constant 8 : index
    %74 = vector.load %arg20[%c0_34, %c8] : memref<8x32xf32, #tpu.memory_space<vmem>>, vector<8x8xf32>
    tpu.vector_store %arg20[%c0_34, %c8], %73 {strides = array<i32>} : memref<8x32xf32, #tpu.memory_space<vmem>>, vector<8x8xf32>,
    %75 = vector.extract_strided_slice %20 {offsets = [0, 16], sizes = [8, 8], strides = [1, 1]} : vector<8x32xbf16> to vector<8x8xbf16>
    %76 = vector.extract_strided_slice %21 {offsets = [0, 16], sizes = [8, 8], strides = [1, 1]} : vector<8x32xbf16> to vector<8x8xbf16>
    %77 = vector.extract_strided_slice %22 {offsets = [0, 16], sizes = [8, 8], strides = [1, 1]} : vector<8x32xbf16> to vector<8x8xbf16>
    %78 = tpu.transpose %76, [1, 0] : vector<8x8xbf16> -> vector<8x8xbf16>
    %cst_35 = arith.constant dense<0.000000e+00> : vector<8x8xf32>
    %79 = tpu.matmul %75, %78, %cst_35 {dimension_numbers = #tpu.dot_dimension_numbers<[1], [0], [0], [1], [0, 0, 1, 1], [], []>} : vector<8x8xbf16>, vector<8x8xbf16>, vector<8x8xf32> -> vector<8x8xf32>
    %cst_36 = arith.constant 0.353553385 : f32
    %80 = vector.broadcast %cst_36 : f32 to vector<8x8xf32>
    %81 = arith.mulf %79, %80 : vector<8x8xf32>
    %82 = arith.addf %81, %32 : vector<8x8xf32>
    %cst_37 = arith.constant dense<0xFF800000> : vector<8xf32>
    %83 = vector.multi_reduction <maximumf>, %82, %cst_37 [1] : vector<8x8xf32> to vector<8xf32>
    %84 = vector.shape_cast %83 : vector<8xf32> to vector<8x1xf32>
    %85 = vector.broadcast %84 : vector<8x1xf32> to vector<8x8xf32>
    %86 = arith.subf %82, %85 : vector<8x8xf32>
    %87 = math.exp %86 : vector<8x8xf32>
    %cst_38 = arith.constant dense<0.000000e+00> : vector<8xf32>
    %88 = vector.multi_reduction <add>, %87, %cst_38 [1] : vector<8x8xf32> to vector<8xf32>
    %89 = vector.shape_cast %88 : vector<8xf32> to vector<8x1xf32>
    %90 = tpu.reciprocal %89 {approx = true} : vector<8x1xf32> -> vector<8x1xf32>
    %91 = arith.truncf %87 : vector<8x8xf32> to vector<8x8xbf16>
    %cst_39 = arith.constant dense<0.000000e+00> : vector<8x8xf32>
    %92 = tpu.matmul %91, %77, %cst_39 {dimension_numbers = #tpu.dot_dimension_numbers<[1], [0], [0], [1], [0, 0, 1, 1], [], []>} : vector<8x8xbf16>, vector<8x8xbf16>, vector<8x8xf32> -> vector<8x8xf32>
    %93 = vector.broadcast %90 : vector<8x1xf32> to vector<8x8xf32>
    %94 = arith.mulf %92, %93 : vector<8x8xf32>
    %c0_40 = arith.constant 0 : index
    %c16 = arith.constant 16 : index
    %95 = vector.load %arg20[%c0_40, %c16] : memref<8x32xf32, #tpu.memory_space<vmem>>, vector<8x8xf32>
    tpu.vector_store %arg20[%c0_40, %c16], %94 {strides = array<i32>} : memref<8x32xf32, #tpu.memory_space<vmem>>, vector<8x8xf32>,
    %96 = vector.extract_strided_slice %20 {offsets = [0, 24], sizes = [8, 8], strides = [1, 1]} : vector<8x32xbf16> to vector<8x8xbf16>
    %97 = vector.extract_strided_slice %21 {offsets = [0, 24], sizes = [8, 8], strides = [1, 1]} : vector<8x32xbf16> to vector<8x8xbf16>
    %98 = vector.extract_strided_slice %22 {offsets = [0, 24], sizes = [8, 8], strides = [1, 1]} : vector<8x32xbf16> to vector<8x8xbf16>
    %99 = tpu.transpose %97, [1, 0] : vector<8x8xbf16> -> vector<8x8xbf16>
    %cst_41 = arith.constant dense<0.000000e+00> : vector<8x8xf32>
    %100 = tpu.matmul %96, %99, %cst_41 {dimension_numbers = #tpu.dot_dimension_numbers<[1], [0], [0], [1], [0, 0, 1, 1], [], []>} : vector<8x8xbf16>, vector<8x8xbf16>, vector<8x8xf32> -> vector<8x8xf32>
    %cst_42 = arith.constant 0.353553385 : f32
    %101 = vector.broadcast %cst_42 : f32 to vector<8x8xf32>
    %102 = arith.mulf %100, %101 : vector<8x8xf32>
    %103 = arith.addf %102, %32 : vector<8x8xf32>
    %cst_43 = arith.constant dense<0xFF800000> : vector<8xf32>
    %104 = vector.multi_reduction <maximumf>, %103, %cst_43 [1] : vector<8x8xf32> to vector<8xf32>
    %105 = vector.shape_cast %104 : vector<8xf32> to vector<8x1xf32>
    %106 = vector.broadcast %105 : vector<8x1xf32> to vector<8x8xf32>
    %107 = arith.subf %103, %106 : vector<8x8xf32>
    %108 = math.exp %107 : vector<8x8xf32>
    %cst_44 = arith.constant dense<0.000000e+00> : vector<8xf32>
    %109 = vector.multi_reduction <add>, %108, %cst_44 [1] : vector<8x8xf32> to vector<8xf32>
    %110 = vector.shape_cast %109 : vector<8xf32> to vector<8x1xf32>
    %111 = tpu.reciprocal %110 {approx = true} : vector<8x1xf32> -> vector<8x1xf32>
    %112 = arith.truncf %108 : vector<8x8xf32> to vector<8x8xbf16>
    %cst_45 = arith.constant dense<0.000000e+00> : vector<8x8xf32>
    %113 = tpu.matmul %112, %98, %cst_45 {dimension_numbers = #tpu.dot_dimension_numbers<[1], [0], [0], [1], [0, 0, 1, 1], [], []>} : vector<8x8xbf16>, vector<8x8xbf16>, vector<8x8xf32> -> vector<8x8xf32>
    %114 = vector.broadcast %111 : vector<8x1xf32> to vector<8x8xf32>
    %115 = arith.mulf %113, %114 : vector<8x8xf32>
    %c0_46 = arith.constant 0 : index
    %c24 = arith.constant 24 : index
    %116 = vector.load %arg20[%c0_46, %c24] : memref<8x32xf32, #tpu.memory_space<vmem>>, vector<8x8xf32>
    tpu.vector_store %arg20[%c0_46, %c24], %115 {strides = array<i32>} : memref<8x32xf32, #tpu.memory_space<vmem>>, vector<8x8xf32>,
    %c0_47 = arith.constant 0 : index
    %c0_48 = arith.constant 0 : index
    %117 = vector.load %arg20[%c0_47, %c0_48] : memref<8x32xf32, #tpu.memory_space<vmem>>, vector<8x32xf32>
    %118 = arith.truncf %117 : vector<8x32xf32> to vector<8x32xbf16>
    %c0_49 = arith.constant 0 : index
    %c0_50 = arith.constant 0 : index
    %119 = vector.load %arg9[%c0_49, %c0_50] : memref<32x32xbf16, #tpu.memory_space<vmem>>, vector<32x32xbf16>
    %cst_51 = arith.constant dense<0.000000e+00> : vector<8x32xf32>
    %120 = tpu.matmul %118, %119, %cst_51 {dimension_numbers = #tpu.dot_dimension_numbers<[1], [0], [0], [1], [0, 0, 1, 1], [], []>} : vector<8x32xbf16>, vector<32x32xbf16>, vector<8x32xf32> -> vector<8x32xf32>
    %c0_52 = arith.constant 0 : index
    %c0_53 = arith.constant 0 : index
    %121 = vector.load %arg10[%c0_52, %c0_53] : memref<1x32xf32, #tpu.memory_space<vmem>>, vector<1x32xf32>
    %122 = vector.broadcast %121 : vector<1x32xf32> to vector<8x32xf32>
    %123 = arith.addf %120, %122 : vector<8x32xf32>
    %124 = arith.addf %1, %123 : vector<8x32xf32>
    %c0_54 = arith.constant 0 : index
    %c0_55 = arith.constant 0 : index
    %125 = vector.load %arg11[%c0_54, %c0_55] : memref<1x32xf32, #tpu.memory_space<vmem>>, vector<1x32xf32>
    %c0_56 = arith.constant 0 : index
    %c0_57 = arith.constant 0 : index
    %126 = vector.load %arg12[%c0_56, %c0_57] : memref<1x32xf32, #tpu.memory_space<vmem>>, vector<1x32xf32>
    %cst_58 = arith.constant dense<0.000000e+00> : vector<8xf32>
    %127 = vector.multi_reduction <add>, %124, %cst_58 [1] : vector<8x32xf32> to vector<8xf32>
    %128 = vector.shape_cast %127 : vector<8xf32> to vector<8x1xf32>
    %cst_59 = arith.constant 3.200000e+01 : f32
    %129 = vector.broadcast %cst_59 : f32 to vector<8x1xf32>
    %130 = arith.divf %128, %129 : vector<8x1xf32>
    %131 = vector.broadcast %130 : vector<8x1xf32> to vector<8x32xf32>
    %132 = arith.subf %124, %131 : vector<8x32xf32>
    %133 = arith.mulf %132, %132 : vector<8x32xf32>
    %cst_60 = arith.constant dense<0.000000e+00> : vector<8xf32>
    %134 = vector.multi_reduction <add>, %133, %cst_60 [1] : vector<8x32xf32> to vector<8xf32>
    %135 = vector.shape_cast %134 : vector<8xf32> to vector<8x1xf32>
    %cst_61 = arith.constant 3.200000e+01 : f32
    %136 = vector.broadcast %cst_61 : f32 to vector<8x1xf32>
    %137 = arith.divf %135, %136 : vector<8x1xf32>
    %138 = vector.broadcast %130 : vector<8x1xf32> to vector<8x32xf32>
    %139 = arith.subf %124, %138 : vector<8x32xf32>
    %cst_62 = arith.constant 9.99999974E-6 : f32
    %140 = vector.broadcast %cst_62 : f32 to vector<8x1xf32>
    %141 = arith.addf %137, %140 : vector<8x1xf32>
    %142 = math.rsqrt %141 : vector<8x1xf32>
    %143 = vector.broadcast %142 : vector<8x1xf32> to vector<8x32xf32>
    %144 = arith.mulf %139, %143 : vector<8x32xf32>
    %145 = vector.broadcast %125 : vector<1x32xf32> to vector<8x32xf32>
    %146 = arith.mulf %144, %145 : vector<8x32xf32>
    %147 = vector.broadcast %126 : vector<1x32xf32> to vector<8x32xf32>
    %148 = arith.addf %146, %147 : vector<8x32xf32>
    %149 = arith.truncf %148 : vector<8x32xf32> to vector<8x32xbf16>
    %c0_63 = arith.constant 0 : index
    %c0_64 = arith.constant 0 : index
    %150 = vector.load %arg13[%c0_63, %c0_64] : memref<32x128xbf16, #tpu.memory_space<vmem>>, vector<32x128xbf16>
    %cst_65 = arith.constant dense<0.000000e+00> : vector<8x128xf32>
    %151 = tpu.matmul %149, %150, %cst_65 {dimension_numbers = #tpu.dot_dimension_numbers<[1], [0], [0], [1], [0, 0, 1, 1], [], []>} : vector<8x32xbf16>, vector<32x128xbf16>, vector<8x128xf32> -> vector<8x128xf32>
    %c0_66 = arith.constant 0 : index
    %c0_67 = arith.constant 0 : index
    %152 = vector.load %arg14[%c0_66, %c0_67] : memref<1x128xf32, #tpu.memory_space<vmem>>, vector<1x128xf32>
    %153 = vector.broadcast %152 : vector<1x128xf32> to vector<8x128xf32>
    %154 = arith.addf %151, %153 : vector<8x128xf32>
    %155 = arith.mulf %154, %154 : vector<8x128xf32>
    %156 = arith.mulf %154, %155 : vector<8x128xf32>
    %cst_68 = arith.constant 4.471500e-02 : f32
    %157 = vector.broadcast %cst_68 : f32 to vector<8x128xf32>
    %158 = arith.mulf %157, %156 : vector<8x128xf32>
    %159 = arith.addf %154, %158 : vector<8x128xf32>
    %cst_69 = arith.constant 0.797884583 : f32
    %160 = vector.broadcast %cst_69 : f32 to vector<8x128xf32>
    %161 = arith.mulf %160, %159 : vector<8x128xf32>
    %162 = math.tanh %161 : vector<8x128xf32>
    %cst_70 = arith.constant 1.000000e+00 : f32
    %163 = vector.broadcast %cst_70 : f32 to vector<8x128xf32>
    %164 = arith.addf %163, %162 : vector<8x128xf32>
    %cst_71 = arith.constant 5.000000e-01 : f32
    %165 = vector.broadcast %cst_71 : f32 to vector<8x128xf32>
    %166 = arith.mulf %165, %164 : vector<8x128xf32>
    %167 = arith.mulf %154, %166 : vector<8x128xf32>
    %168 = arith.truncf %167 : vector<8x128xf32> to vector<8x128xbf16>
    %c0_72 = arith.constant 0 : index
    %c0_73 = arith.constant 0 : index
    %169 = vector.load %arg15[%c0_72, %c0_73] : memref<128x32xbf16, #tpu.memory_space<vmem>>, vector<128x32xbf16>
    %cst_74 = arith.constant dense<0.000000e+00> : vector<8x32xf32>
    %170 = tpu.matmul %168, %169, %cst_74 {dimension_numbers = #tpu.dot_dimension_numbers<[1], [0], [0], [1], [0, 0, 1, 1], [], []>} : vector<8x128xbf16>, vector<128x32xbf16>, vector<8x32xf32> -> vector<8x32xf32>
    %c0_75 = arith.constant 0 : index
    %c0_76 = arith.constant 0 : index
    %171 = vector.load %arg16[%c0_75, %c0_76] : memref<1x32xf32, #tpu.memory_space<vmem>>, vector<1x32xf32>
    %172 = vector.broadcast %171 : vector<1x32xf32> to vector<8x32xf32>
    %173 = arith.addf %170, %172 : vector<8x32xf32>
    %174 = arith.addf %148, %173 : vector<8x32xf32>
    %c0_77 = arith.constant 0 : index
    %c0_78 = arith.constant 0 : index
    %175 = vector.load %arg17[%c0_77, %c0_78] : memref<1x32xf32, #tpu.memory_space<vmem>>, vector<1x32xf32>
    %c0_79 = arith.constant 0 : index
    %c0_80 = arith.constant 0 : index
    %176 = vector.load %arg18[%c0_79, %c0_80] : memref<1x32xf32, #tpu.memory_space<vmem>>, vector<1x32xf32>
    %cst_81 = arith.constant dense<0.000000e+00> : vector<8xf32>
    %177 = vector.multi_reduction <add>, %174, %cst_81 [1] : vector<8x32xf32> to vector<8xf32>
    %178 = vector.shape_cast %177 : vector<8xf32> to vector<8x1xf32>
    %cst_82 = arith.constant 3.200000e+01 : f32
    %179 = vector.broadcast %cst_82 : f32 to vector<8x1xf32>
    %180 = arith.divf %178, %179 : vector<8x1xf32>
    %181 = vector.broadcast %180 : vector<8x1xf32> to vector<8x32xf32>
    %182 = arith.subf %174, %181 : vector<8x32xf32>
    %183 = arith.mulf %182, %182 : vector<8x32xf32>
    %cst_83 = arith.constant dense<0.000000e+00> : vector<8xf32>
    %184 = vector.multi_reduction <add>, %183, %cst_83 [1] : vector<8x32xf32> to vector<8xf32>
    %185 = vector.shape_cast %184 : vector<8xf32> to vector<8x1xf32>
    %cst_84 = arith.constant 3.200000e+01 : f32
    %186 = vector.broadcast %cst_84 : f32 to vector<8x1xf32>
    %187 = arith.divf %185, %186 : vector<8x1xf32>
    %188 = vector.broadcast %180 : vector<8x1xf32> to vector<8x32xf32>
    %189 = arith.subf %174, %188 : vector<8x32xf32>
    %cst_85 = arith.constant 9.99999974E-6 : f32
    %190 = vector.broadcast %cst_85 : f32 to vector<8x1xf32>
    %191 = arith.addf %187, %190 : vector<8x1xf32>
    %192 = math.rsqrt %191 : vector<8x1xf32>
    %193 = vector.broadcast %192 : vector<8x1xf32> to vector<8x32xf32>
    %194 = arith.mulf %189, %193 : vector<8x32xf32>
    %195 = vector.broadcast %175 : vector<1x32xf32> to vector<8x32xf32>
    %196 = arith.mulf %194, %195 : vector<8x32xf32>
    %197 = vector.broadcast %176 : vector<1x32xf32> to vector<8x32xf32>
    %198 = arith.addf %196, %197 : vector<8x32xf32>
    %c0_86 = arith.constant 0 : index
    %c0_87 = arith.constant 0 : index
    %c0_88 = arith.constant 0 : index
    %199 = vector.load %arg19[%c0_86, %c0_87, %c0_88] : memref<1x8x32xf32, #tpu.memory_space<vmem>>, vector<1x8x32xf32>
    %200 = vector.shape_cast %199 : vector<1x8x32xf32> to vector<8x32xf32>
    %201 = vector.shape_cast %198 : vector<8x32xf32> to vector<1x8x32xf32>
    tpu.vector_store %arg19[%c0_86, %c0_87, %c0_88], %201 {strides = array<i32>} : memref<1x8x32xf32, #tpu.memory_space<vmem>>, vector<1x8x32xf32>,
    return
  }
  func.func @transform_0(%arg0: i32) -> (i32, i32, i32) {
    %c0_i32 = arith.constant 0 : i32
    %c0_i32_0 = arith.constant 0 : i32
    %c0_i32_1 = arith.constant 0 : i32
    return %arg0, %c0_i32, %c0_i32_0 : i32, i32, i32
  }
  func.func @transform_1(%arg0: i32) -> (i32, i32, i32) {
    %c0_i32 = arith.constant 0 : i32
    %c0_i32_0 = arith.constant 0 : i32
    %c0_i32_1 = arith.constant 0 : i32
    return %arg0, %c0_i32, %c0_i32_0 : i32, i32, i32
  }
  func.func @transform_2(%arg0: i32) -> (i32, i32) {
    %c0_i32 = arith.constant 0 : i32
    %c0_i32_0 = arith.constant 0 : i32
    %c0_i32_1 = arith.constant 0 : i32
    return %c0_i32, %c0_i32_0 : i32, i32
  }
  func.func @transform_3(%arg0: i32) -> (i32, i32) {
    %c0_i32 = arith.constant 0 : i32
    %c0_i32_0 = arith.constant 0 : i32
    %c0_i32_1 = arith.constant 0 : i32
    return %c0_i32, %c0_i32_0 : i32, i32
  }
  func.func @transform_4(%arg0: i32) -> (i32, i32) {
    %c0_i32 = arith.constant 0 : i32
    %c0_i32_0 = arith.constant 0 : i32
    %c0_i32_1 = arith.constant 0 : i32
    return %c0_i32, %c0_i32_0 : i32, i32
  }
  func.func @transform_5(%arg0: i32) -> (i32, i32) {
    %c0_i32 = arith.constant 0 : i32
    %c0_i32_0 = arith.constant 0 : i32
    %c0_i32_1 = arith.constant 0 : i32
    return %c0_i32, %c0_i32_0 : i32, i32
  }
  func.func @transform_6(%arg0: i32) -> (i32, i32) {
    %c0_i32 = arith.constant 0 : i32
    %c0_i32_0 = arith.constant 0 : i32
    %c0_i32_1 = arith.constant 0 : i32
    return %c0_i32, %c0_i32_0 : i32, i32
  }
  func.func @transform_7(%arg0: i32) -> (i32, i32) {
    %c0_i32 = arith.constant 0 : i32
    %c0_i32_0 = arith.constant 0 : i32
    %c0_i32_1 = arith.constant 0 : i32
    return %c0_i32, %c0_i32_0 : i32, i32
  }
  func.func @transform_8(%arg0: i32) -> (i32, i32) {
    %c0_i32 = arith.constant 0 : i32
    %c0_i32_0 = arith.constant 0 : i32
    %c0_i32_1 = arith.constant 0 : i32
    return %c0_i32, %c0_i32_0 : i32, i32
  }
  func.func @transform_9(%arg0: i32) -> (i32, i32) {
    %c0_i32 = arith.constant 0 : i32
    %c0_i32_0 = arith.constant 0 : i32
    %c0_i32_1 = arith.constant 0 : i32
    return %c0_i32, %c0_i32_0 : i32, i32
  }
  func.func @transform_10(%arg0: i32) -> (i32, i32) {
    %c0_i32 = arith.constant 0 : i32
    %c0_i32_0 = arith.constant 0 : i32
    %c0_i32_1 = arith.constant 0 : i32
    return %c0_i32, %c0_i32_0 : i32, i32
  }
  func.func @transform_11(%arg0: i32) -> (i32, i32) {
    %c0_i32 = arith.constant 0 : i32
    %c0_i32_0 = arith.constant 0 : i32
    %c0_i32_1 = arith.constant 0 : i32
    return %c0_i32, %c0_i32_0 : i32, i32
  }
  func.func @transform_12(%arg0: i32) -> (i32, i32) {
    %c0_i32 = arith.constant 0 : i32
    %c0_i32_0 = arith.constant 0 : i32
    %c0_i32_1 = arith.constant 0 : i32
    return %c0_i32, %c0_i32_0 : i32, i32
  }
  func.func @transform_13(%arg0: i32) -> (i32, i32) {
    %c0_i32 = arith.constant 0 : i32
    %c0_i32_0 = arith.constant 0 : i32
    %c0_i32_1 = arith.constant 0 : i32
    return %c0_i32, %c0_i32_0 : i32, i32
  }
  func.func @transform_14(%arg0: i32) -> (i32, i32) {
    %c0_i32 = arith.constant 0 : i32
    %c0_i32_0 = arith.constant 0 : i32
    %c0_i32_1 = arith.constant 0 : i32
    return %c0_i32, %c0_i32_0 : i32, i32
  }
  func.func @transform_15(%arg0: i32) -> (i32, i32) {
    %c0_i32 = arith.constant 0 : i32
    %c0_i32_0 = arith.constant 0 : i32
    %c0_i32_1 = arith.constant 0 : i32
    return %c0_i32, %c0_i32_0 : i32, i32
  }
  func.func @transform_16(%arg0: i32) -> (i32, i32) {
    %c0_i32 = arith.constant 0 : i32
    %c0_i32_0 = arith.constant 0 : i32
    %c0_i32_1 = arith.constant 0 : i32
    return %c0_i32, %c0_i32_0 : i32, i32
  }
  func.func @transform_17(%arg0: i32) -> (i32, i32) {
    %c0_i32 = arith.constant 0 : i32
    %c0_i32_0 = arith.constant 0 : i32
    %c0_i32_1 = arith.constant 0 : i32
    return %c0_i32, %c0_i32_0 : i32, i32
  }
  func.func @transform_18(%arg0: i32) -> (i32, i32, i32) {
    %c0_i32 = arith.constant 0 : i32
    %c0_i32_0 = arith.constant 0 : i32
    %c0_i32_1 = arith.constant 0 : i32
    return %arg0, %c0_i32, %c0_i32_0 : i32, i32, i32
  }
}

</mosaic_0001>

<llo_original>
// kernel: tpu_custom_call.1
$region0: #{tpu_custom_call.1}
  #allocation0 [shape = 'u32[]', space=smem, size = 0x4, offset = 0x4, fixed_abs, tag = 'smem constant byte address 0x4 - core index']
  #allocation1 [shape = 'u32[144,128]{1,0:T(1,128)}', space=vmem, size = 0x12000, scoped, tag = 'internal scratch']
  #allocation2 [shape = 'f32[8,32]{1,0:T(8,128)}', space=vmem, size = 0x1000, scoped, tag = 'scratch operand']
  %s0 = inlined_call_operand.vmem [shape: f32[2,8,32], index: 0, kind: input, shape index: {}]
  %s1 = inlined_call_operand.hbm [shape: f32[2,1,8], index: 1, kind: input, shape index: {}]
  %s2 = inlined_call_operand.vmem [shape: bf16[32,32], index: 2, kind: input, shape index: {}]
  %s3 = inlined_call_operand.vmem [shape: f32[1,32], index: 3, kind: input, shape index: {}]
  %s4 = inlined_call_operand.vmem [shape: bf16[32,32], index: 4, kind: input, shape index: {}]
  %s5 = inlined_call_operand.vmem [shape: f32[1,32], index: 5, kind: input, shape index: {}]
  %s6 = inlined_call_operand.vmem [shape: bf16[32,32], index: 6, kind: input, shape index: {}]
  %s7 = inlined_call_operand.vmem [shape: f32[1,32], index: 7, kind: input, shape index: {}]
  %s8 = inlined_call_operand.vmem [shape: bf16[32,32], index: 8, kind: input, shape index: {}]
  %s9 = inlined_call_operand.vmem [shape: f32[1,32], index: 9, kind: input, shape index: {}]
  %s10 = inlined_call_operand.vmem [shape: f32[1,32], index: 10, kind: input, shape index: {}]
  %s11 = inlined_call_operand.vmem [shape: f32[1,32], index: 11, kind: input, shape index: {}]
  %s12 = inlined_call_operand.hbm [shape: bf16[32,128], index: 12, kind: input, shape index: {}]
  %s13 = inlined_call_operand.vmem [shape: f32[1,128], index: 13, kind: input, shape index: {}]
  %s14 = inlined_call_operand.vmem [shape: bf16[128,32], index: 14, kind: input, shape index: {}]
  %s15 = inlined_call_operand.vmem [shape: f32[1,32], index: 15, kind: input, shape index: {}]
  %s16 = inlined_call_operand.vmem [shape: f32[1,32], index: 16, kind: input, shape index: {}]
  %s17 = inlined_call_operand.vmem [shape: f32[1,32], index: 17, kind: input, shape index: {}]
  %s18 = inlined_call_operand.hbm [shape: f32[2,8,32], index: 18, kind: output, shape index: {}]
  %s19 = sld [smem:[#allocation0]]
  $region113: #{tpu_custom_call.1} parent=0
    _
  %s21 = ssub.s32 1, %s19
  %s22 = scalar_select 0, %s21, %s19
  $region1: #{tpu_custom_call.1} parent=0
    #allocation3 [shape = 'u8[1024]{0}', space=vmem, size = 0x400, scoped, tag = 'input window, operand 1']
    #allocation4 [shape = 's32[2]{0}', space=sflag, size = 0x8, scoped, tag = 'scoped memory for tpu_custom_call.1']
    #allocation5 [shape = 's32[2]{0}', space=sflag, size = 0x8, scoped, tag = 'scoped memory for tpu_custom_call.1']
    #allocation6 [shape = 'u8[8192]{0}', space=vmem, size = 0x2000, scoped, tag = 'input window, operand 12, single buffered']
    #allocation7 [shape = 's32[1]{0}', space=sflag, size = 0x4, scoped, tag = 'scoped memory for tpu_custom_call.1']
    #allocation8 [shape = 'u8[8192]{0}', space=vmem, size = 0x2000, scoped, tag = 'output window, operand 0']
    %23 = vsyncpa [#allocation4], 0
    %s24 = scalar_lea.sflag [#allocation4], 1
    %25 = vsyncpa %s24, 0
    %26 = vsyncpa [#allocation7], 0
    %27 = vsyncpa [#allocation5], 0
    %s28 = scalar_lea.sflag [#allocation5], 1
    %29 = vsyncpa %s28, 0
    loop: start=0, step=1, limit=4
    $region2: #{tpu_custom_call.1} parent=1 // loop_pre_header
      _
    $region3: #{tpu_custom_call.1} parent=1 // loop_header
      %s31 = sphi 0, %s35
      %p32 = scmp.ge.s32.totalorder %s31, 4
      %s41 = sphi 0, %s43
      %s44 = sphi 0, %s41
      %s45 = sphi 0, %s44
      %s61 = sphi 0, %s45
      %s67 = sphi 0, %s69
      %s70 = sphi 0, %s67
      %s71 = sphi 0, %s70
      %s87 = sphi 0, %s71
      %s91 = sphi 0, %s91
      %s93 = sphi 0, %s91
      %s94 = sphi 0, %s93
      %s108 = sphi 0, %s94
      %s112 = sphi 0, %s112
      %s114 = sphi 0, %s112
      %s115 = sphi 0, %s114
      %s129 = sphi 0, %s115
      %s133 = sphi 0, %s133
      %s135 = sphi 0, %s133
      %s136 = sphi 0, %s135
      %s150 = sphi 0, %s136
      %s154 = sphi 0, %s154
      %s156 = sphi 0, %s154
      %s157 = sphi 0, %s156
      %s171 = sphi 0, %s157
      %s175 = sphi 0, %s175
      %s177 = sphi 0, %s175
      %s178 = sphi 0, %s177
      %s192 = sphi 0, %s178
      %s196 = sphi 0, %s196
      %s198 = sphi 0, %s196
      %s199 = sphi 0, %s198
      %s213 = sphi 0, %s199
      %s217 = sphi 0, %s217
      %s219 = sphi 0, %s217
      %s220 = sphi 0, %s219
      %s234 = sphi 0, %s220
      %s238 = sphi 0, %s238
      %s240 = sphi 0, %s238
      %s241 = sphi 0, %s240
      %s255 = sphi 0, %s241
      %s259 = sphi 0, %s259
      %s261 = sphi 0, %s259
      %s262 = sphi 0, %s261
      %s276 = sphi 0, %s262
      %s280 = sphi 0, %s280
      %s282 = sphi 0, %s280
      %s283 = sphi 0, %s282
      %s297 = sphi 0, %s283
      %s301 = sphi 0, %s301
      %s303 = sphi 0, %s301
      %s304 = sphi 0, %s303
      %s318 = sphi 0, %s304
      %s322 = sphi 0, %s322
      %s324 = sphi 0, %s322
      %s325 = sphi 0, %s324
      %s339 = sphi 0, %s325
      %s343 = sphi 0, %s343
      %s345 = sphi 0, %s343
      %s346 = sphi 0, %s345
      %s360 = sphi 0, %s346
      %s364 = sphi 0, %s364
      %s366 = sphi 0, %s364
      %s367 = sphi 0, %s366
      %s381 = sphi 0, %s367
      %s385 = sphi 0, %s385
      %s387 = sphi 0, %s385
      %s388 = sphi 0, %s387
      %s402 = sphi 0, %s388
      %s406 = sphi 0, %s406
      %s408 = sphi 0, %s406
      %s409 = sphi 0, %s408
      %s423 = sphi 0, %s409
      %s429 = sphi 0, %s431
      %s432 = sphi 0, %s429
      %s433 = sphi 0, %s432
      %s449 = sphi 0, %s433
    $region4: #{tpu_custom_call.1} parent=1 // loop_header_branch
      %34 = sbr.rel (%p32) target = $region8
    $region5: #{tpu_custom_call.1} parent=1 // loop_body
      %s36 = ssub.s32 %s31, 1
      %s37 = ssub.s32 %s31, 2
      %s38 = sadd.s32 %s31, 1
      %s39 = ssub.s32 %s31, %s38
      %p40 = scmp.eq.s32.totalorder %s39, 0
      %s42 = sadd.s32 %s41, 1
      %s43 = scalar_select %p40, %s41, %s42
      %p46 = pneg %p40
      %p47 = scmp.eq.s32.totalorder %s31, 1
      %p48 = por %p46, %p47
      %p49 = scmp.ne.s32.totalorder %s41, %s44
      %p50 = scmp.eq.s32.totalorder %s31, 0
      %p51 = por %p49, %p50
      %p52 = scmp.ne.s32.totalorder %s41, %s44
      %p53 = scmp.eq.s32.totalorder %s36, 1
      %p54 = por %p52, %p53
      %p55 = scmp.ne.s32.totalorder %s44, %s45
      %p56 = scmp.eq.s32.totalorder %s36, 0
      %p57 = por %p55, %p56
      %p58 = scmp.ne.s32.totalorder %s44, %s45
      %p59 = scmp.eq.s32.totalorder %s37, 1
      %p60 = por %p58, %p59
      %p62 = scmp.ne.s32.totalorder %s45, %s61
      %p63 = scmp.eq.s32.totalorder %s37, 0
      %p64 = por %p62, %p63
      %s65 = ssub.s32 %s31, %s38
      %p66 = scmp.eq.s32.totalorder %s65, 0
      %s68 = sadd.s32 %s67, 1
      %s69 = scalar_select %p66, %s67, %s68
      %p72 = pneg %p66
      %p73 = scmp.eq.s32.totalorder %s31, 1
      %p74 = por %p72, %p73
      %p75 = scmp.ne.s32.totalorder %s67, %s70
      %p76 = scmp.eq.s32.totalorder %s31, 0
      %p77 = por %p75, %p76
      %p78 = scmp.ne.s32.totalorder %s67, %s70
      %p79 = scmp.eq.s32.totalorder %s36, 1
      %p80 = por %p78, %p79
      %p81 = scmp.ne.s32.totalorder %s70, %s71
      %p82 = scmp.eq.s32.totalorder %s36, 0
      %p83 = por %p81, %p82
      %p84 = scmp.ne.s32.totalorder %s70, %s71
      %p85 = scmp.eq.s32.totalorder %s37, 1
      %p86 = por %p84, %p85
      %p88 = scmp.ne.s32.totalorder %s71, %s87
      %p89 = scmp.eq.s32.totalorder %s37, 0
      %p90 = por %p88, %p89
      %s92 = sadd.s32 %s91, 1
      %p95 = scmp.eq.s32.totalorder %s31, 1
      %p96 = scmp.ne.s32.totalorder %s91, %s93
      %p97 = scmp.eq.s32.totalorder %s31, 0
      %p98 = por %p96, %p97
      %p99 = scmp.ne.s32.totalorder %s91, %s93
      %p100 = scmp.eq.s32.totalorder %s36, 1
      %p101 = por %p99, %p100
      %p102 = scmp.ne.s32.totalorder %s93, %s94
      %p103 = scmp.eq.s32.totalorder %s36, 0
      %p104 = por %p102, %p103
      %p105 = scmp.ne.s32.totalorder %s93, %s94
      %p106 = scmp.eq.s32.totalorder %s37, 1
      %p107 = por %p105, %p106
      %p109 = scmp.ne.s32.totalorder %s94, %s108
      %p110 = scmp.eq.s32.totalorder %s37, 0
      %p111 = por %p109, %p110
      %s113 = sadd.s32 %s112, 1
      %p116 = scmp.eq.s32.totalorder %s31, 1
      %p117 = scmp.ne.s32.totalorder %s112, %s114
      %p118 = scmp.eq.s32.totalorder %s31, 0
      %p119 = por %p117, %p118
      %p120 = scmp.ne.s32.totalorder %s112, %s114
      %p121 = scmp.eq.s32.totalorder %s36, 1
      %p122 = por %p120, %p121
      %p123 = scmp.ne.s32.totalorder %s114, %s115
      %p124 = scmp.eq.s32.totalorder %s36, 0
      %p125 = por %p123, %p124
      %p126 = scmp.ne.s32.totalorder %s114, %s115
      %p127 = scmp.eq.s32.totalorder %s37, 1
      %p128 = por %p126, %p127
      %p130 = scmp.ne.s32.totalorder %s115, %s129
      %p131 = scmp.eq.s32.totalorder %s37, 0
      %p132 = por %p130, %p131
      %s134 = sadd.s32 %s133, 1
      %p137 = scmp.eq.s32.totalorder %s31, 1
      %p138 = scmp.ne.s32.totalorder %s133, %s135
      %p139 = scmp.eq.s32.totalorder %s31, 0
      %p140 = por %p138, %p139
      %p141 = scmp.ne.s32.totalorder %s133, %s135
      %p142 = scmp.eq.s32.totalorder %s36, 1
      %p143 = por %p141, %p142
      %p144 = scmp.ne.s32.totalorder %s135, %s136
      %p145 = scmp.eq.s32.totalorder %s36, 0
      %p146 = por %p144, %p145
      %p147 = scmp.ne.s32.totalorder %s135, %s136
      %p148 = scmp.eq.s32.totalorder %s37, 1
      %p149 = por %p147, %p148
      %p151 = scmp.ne.s32.totalorder %s136, %s150
      %p152 = scmp.eq.s32.totalorder %s37, 0
      %p153 = por %p151, %p152
      %s155 = sadd.s32 %s154, 1
      %p158 = scmp.eq.s32.totalorder %s31, 1
      %p159 = scmp.ne.s32.totalorder %s154, %s156
      %p160 = scmp.eq.s32.totalorder %s31, 0
      %p161 = por %p159, %p160
      %p162 = scmp.ne.s32.totalorder %s154, %s156
      %p163 = scmp.eq.s32.totalorder %s36, 1
      %p164 = por %p162, %p163
      %p165 = scmp.ne.s32.totalorder %s156, %s157
      %p166 = scmp.eq.s32.totalorder %s36, 0
      %p167 = por %p165, %p166
      %p168 = scmp.ne.s32.totalorder %s156, %s157
      %p169 = scmp.eq.s32.totalorder %s37, 1
      %p170 = por %p168, %p169
      %p172 = scmp.ne.s32.totalorder %s157, %s171
      %p173 = scmp.eq.s32.totalorder %s37, 0
      %p174 = por %p172, %p173
      %s176 = sadd.s32 %s175, 1
      %p179 = scmp.eq.s32.totalorder %s31, 1
      %p180 = scmp.ne.s32.totalorder %s175, %s177
      %p181 = scmp.eq.s32.totalorder %s31, 0
      %p182 = por %p180, %p181
      %p183 = scmp.ne.s32.totalorder %s175, %s177
      %p184 = scmp.eq.s32.totalorder %s36, 1
      %p185 = por %p183, %p184
      %p186 = scmp.ne.s32.totalorder %s177, %s178
      %p187 = scmp.eq.s32.totalorder %s36, 0
      %p188 = por %p186, %p187
      %p189 = scmp.ne.s32.totalorder %s177, %s178
      %p190 = scmp.eq.s32.totalorder %s37, 1
      %p191 = por %p189, %p190
      %p193 = scmp.ne.s32.totalorder %s178, %s192
      %p194 = scmp.eq.s32.totalorder %s37, 0
      %p195 = por %p193, %p194
      %s197 = sadd.s32 %s196, 1
      %p200 = scmp.eq.s32.totalorder %s31, 1
      %p201 = scmp.ne.s32.totalorder %s196, %s198
      %p202 = scmp.eq.s32.totalorder %s31, 0
      %p203 = por %p201, %p202
      %p204 = scmp.ne.s32.totalorder %s196, %s198
      %p205 = scmp.eq.s32.totalorder %s36, 1
      %p206 = por %p204, %p205
      %p207 = scmp.ne.s32.totalorder %s198, %s199
      %p208 = scmp.eq.s32.totalorder %s36, 0
      %p209 = por %p207, %p208
      %p210 = scmp.ne.s32.totalorder %s198, %s199
      %p211 = scmp.eq.s32.totalorder %s37, 1
      %p212 = por %p210, %p211
      %p214 = scmp.ne.s32.totalorder %s199, %s213
      %p215 = scmp.eq.s32.totalorder %s37, 0
      %p216 = por %p214, %p215
      %s218 = sadd.s32 %s217, 1
      %p221 = scmp.eq.s32.totalorder %s31, 1
      %p222 = scmp.ne.s32.totalorder %s217, %s219
      %p223 = scmp.eq.s32.totalorder %s31, 0
      %p224 = por %p222, %p223
      %p225 = scmp.ne.s32.totalorder %s217, %s219
      %p226 = scmp.eq.s32.totalorder %s36, 1
      %p227 = por %p225, %p226
      %p228 = scmp.ne.s32.totalorder %s219, %s220
      %p229 = scmp.eq.s32.totalorder %s36, 0
      %p230 = por %p228, %p229
      %p231 = scmp.ne.s32.totalorder %s219, %s220
      %p232 = scmp.eq.s32.totalorder %s37, 1
      %p233 = por %p231, %p232
      %p235 = scmp.ne.s32.totalorder %s220, %s234
      %p236 = scmp.eq.s32.totalorder %s37, 0
      %p237 = por %p235, %p236
      %s239 = sadd.s32 %s238, 1
      %p242 = scmp.eq.s32.totalorder %s31, 1
      %p243 = scmp.ne.s32.totalorder %s238, %s240
      %p244 = scmp.eq.s32.totalorder %s31, 0
      %p245 = por %p243, %p244
      %p246 = scmp.ne.s32.totalorder %s238, %s240
      %p247 = scmp.eq.s32.totalorder %s36, 1
      %p248 = por %p246, %p247
      %p249 = scmp.ne.s32.totalorder %s240, %s241
      %p250 = scmp.eq.s32.totalorder %s36, 0
      %p251 = por %p249, %p250
      %p252 = scmp.ne.s32.totalorder %s240, %s241
      %p253 = scmp.eq.s32.totalorder %s37, 1
      %p254 = por %p252, %p253
      %p256 = scmp.ne.s32.totalorder %s241, %s255
      %p257 = scmp.eq.s32.totalorder %s37, 0
      %p258 = por %p256, %p257
      %s260 = sadd.s32 %s259, 1
      %p263 = scmp.eq.s32.totalorder %s31, 1
      %p264 = scmp.ne.s32.totalorder %s259, %s261
      %p265 = scmp.eq.s32.totalorder %s31, 0
      %p266 = por %p264, %p265
      %p267 = scmp.ne.s32.totalorder %s259, %s261
      %p268 = scmp.eq.s32.totalorder %s36, 1
      %p269 = por %p267, %p268
      %p270 = scmp.ne.s32.totalorder %s261, %s262
      %p271 = scmp.eq.s32.totalorder %s36, 0
      %p272 = por %p270, %p271
      %p273 = scmp.ne.s32.totalorder %s261, %s262
      %p274 = scmp.eq.s32.totalorder %s37, 1
      %p275 = por %p273, %p274
      %p277 = scmp.ne.s32.totalorder %s262, %s276
      %p278 = scmp.eq.s32.totalorder %s37, 0
      %p279 = por %p277, %p278
      %s281 = sadd.s32 %s280, 1
      %p284 = scmp.eq.s32.totalorder %s31, 1
      %p285 = scmp.ne.s32.totalorder %s280, %s282
      %p286 = scmp.eq.s32.totalorder %s31, 0
      %p287 = por %p285, %p286
      %p288 = scmp.ne.s32.totalorder %s280, %s282
      %p289 = scmp.eq.s32.totalorder %s36, 1
      %p290 = por %p288, %p289
      %p291 = scmp.ne.s32.totalorder %s282, %s283
      %p292 = scmp.eq.s32.totalorder %s36, 0
      %p293 = por %p291, %p292
      %p294 = scmp.ne.s32.totalorder %s282, %s283
      %p295 = scmp.eq.s32.totalorder %s37, 1
      %p296 = por %p294, %p295
      %p298 = scmp.ne.s32.totalorder %s283, %s297
      %p299 = scmp.eq.s32.totalorder %s37, 0
      %p300 = por %p298, %p299
      %s302 = sadd.s32 %s301, 1
      %p305 = scmp.eq.s32.totalorder %s31, 1
      %p306 = scmp.ne.s32.totalorder %s301, %s303
      %p307 = scmp.eq.s32.totalorder %s31, 0
      %p308 = por %p306, %p307
      %p309 = scmp.ne.s32.totalorder %s301, %s303
      %p310 = scmp.eq.s32.totalorder %s36, 1
      %p311 = por %p309, %p310
      %p312 = scmp.ne.s32.totalorder %s303, %s304
      %p313 = scmp.eq.s32.totalorder %s36, 0
      %p314 = por %p312, %p313
      %p315 = scmp.ne.s32.totalorder %s303, %s304
      %p316 = scmp.eq.s32.totalorder %s37, 1
      %p317 = por %p315, %p316
      %p319 = scmp.ne.s32.totalorder %s304, %s318
      %p320 = scmp.eq.s32.totalorder %s37, 0
      %p321 = por %p319, %p320
      %s323 = sadd.s32 %s322, 1
      %p326 = scmp.eq.s32.totalorder %s31, 1
      %p327 = scmp.ne.s32.totalorder %s322, %s324
      %p328 = scmp.eq.s32.totalorder %s31, 0
      %p329 = por %p327, %p328
      %p330 = scmp.ne.s32.totalorder %s322, %s324
      %p331 = scmp.eq.s32.totalorder %s36, 1
      %p332 = por %p330, %p331
      %p333 = scmp.ne.s32.totalorder %s324, %s325
      %p334 = scmp.eq.s32.totalorder %s36, 0
      %p335 = por %p333, %p334
      %p336 = scmp.ne.s32.totalorder %s324, %s325
      %p337 = scmp.eq.s32.totalorder %s37, 1
      %p338 = por %p336, %p337
      %p340 = scmp.ne.s32.totalorder %s325, %s339
      %p341 = scmp.eq.s32.totalorder %s37, 0
      %p342 = por %p340, %p341
      %s344 = sadd.s32 %s343, 1
      %p347 = scmp.eq.s32.totalorder %s31, 1
      %p348 = scmp.ne.s32.totalorder %s343, %s345
      %p349 = scmp.eq.s32.totalorder %s31, 0
      %p350 = por %p348, %p349
      %p351 = scmp.ne.s32.totalorder %s343, %s345
      %p352 = scmp.eq.s32.totalorder %s36, 1
      %p353 = por %p351, %p352
      %p354 = scmp.ne.s32.totalorder %s345, %s346
      %p355 = scmp.eq.s32.totalorder %s36, 0
      %p356 = por %p354, %p355
      %p357 = scmp.ne.s32.totalorder %s345, %s346
      %p358 = scmp.eq.s32.totalorder %s37, 1
      %p359 = por %p357, %p358
      %p361 = scmp.ne.s32.totalorder %s346, %s360
      %p362 = scmp.eq.s32.totalorder %s37, 0
      %p363 = por %p361, %p362
      %s365 = sadd.s32 %s364, 1
      %p368 = scmp.eq.s32.totalorder %s31, 1
      %p369 = scmp.ne.s32.totalorder %s364, %s366
      %p370 = scmp.eq.s32.totalorder %s31, 0
      %p371 = por %p369, %p370
      %p372 = scmp.ne.s32.totalorder %s364, %s366
      %p373 = scmp.eq.s32.totalorder %s36, 1
      %p374 = por %p372, %p373
      %p375 = scmp.ne.s32.totalorder %s366, %s367
      %p376 = scmp.eq.s32.totalorder %s36, 0
      %p377 = por %p375, %p376
      %p378 = scmp.ne.s32.totalorder %s366, %s367
      %p379 = scmp.eq.s32.totalorder %s37, 1
      %p380 = por %p378, %p379
      %p382 = scmp.ne.s32.totalorder %s367, %s381
      %p383 = scmp.eq.s32.totalorder %s37, 0
      %p384 = por %p382, %p383
      %s386 = sadd.s32 %s385, 1
      %p389 = scmp.eq.s32.totalorder %s31, 1
      %p390 = scmp.ne.s32.totalorder %s385, %s387
      %p391 = scmp.eq.s32.totalorder %s31, 0
      %p392 = por %p390, %p391
      %p393 = scmp.ne.s32.totalorder %s385, %s387
      %p394 = scmp.eq.s32.totalorder %s36, 1
      %p395 = por %p393, %p394
      %p396 = scmp.ne.s32.totalorder %s387, %s388
      %p397 = scmp.eq.s32.totalorder %s36, 0
      %p398 = por %p396, %p397
      %p399 = scmp.ne.s32.totalorder %s387, %s388
      %p400 = scmp.eq.s32.totalorder %s37, 1
      %p401 = por %p399, %p400
      %p403 = scmp.ne.s32.totalorder %s388, %s402
      %p404 = scmp.eq.s32.totalorder %s37, 0
      %p405 = por %p403, %p404
      %s407 = sadd.s32 %s406, 1
      %p410 = scmp.eq.s32.totalorder %s31, 1
      %p411 = scmp.ne.s32.totalorder %s406, %s408
      %p412 = scmp.eq.s32.totalorder %s31, 0
      %p413 = por %p411, %p412
      %p414 = scmp.ne.s32.totalorder %s406, %s408
      %p415 = scmp.eq.s32.totalorder %s36, 1
      %p416 = por %p414, %p415
      %p417 = scmp.ne.s32.totalorder %s408, %s409
      %p418 = scmp.eq.s32.totalorder %s36, 0
      %p419 = por %p417, %p418
      %p420 = scmp.ne.s32.totalorder %s408, %s409
      %p421 = scmp.eq.s32.totalorder %s37, 1
      %p422 = por %p420, %p421
      %p424 = scmp.ne.s32.totalorder %s409, %s423
      %p425 = scmp.eq.s32.totalorder %s37, 0
      %p426 = por %p424, %p425
      %s427 = ssub.s32 %s31, %s38
      %p428 = scmp.eq.s32.totalorder %s427, 0
      %s430 = sadd.s32 %s429, 1
      %s431 = scalar_select %p428, %s429, %s430
      %p434 = pneg %p428
      %p435 = scmp.eq.s32.totalorder %s31, 1
      %p436 = por %p434, %p435
      %p437 = scmp.ne.s32.totalorder %s429, %s432
      %p438 = scmp.eq.s32.totalorder %s31, 0
      %p439 = por %p437, %p438
      %p440 = scmp.ne.s32.totalorder %s429, %s432
      %p441 = scmp.eq.s32.totalorder %s36, 1
      %p442 = por %p440, %p441
      %p443 = scmp.ne.s32.totalorder %s432, %s433
      %p444 = scmp.eq.s32.totalorder %s36, 0
      %p445 = por %p443, %p444
      %p446 = scmp.ne.s32.totalorder %s432, %s433
      %p447 = scmp.eq.s32.totalorder %s37, 1
      %p448 = por %p446, %p447
      %p450 = scmp.ne.s32.totalorder %s433, %s449
      %p451 = scmp.eq.s32.totalorder %s37, 0
      %p452 = por %p450, %p451
      %p453 = scmp.le.s32.totalorder 1, %s31
      %p454 = scmp.lt.s32.totalorder %s31, 3
      %p455 = pnand %p453, %p454
      %p456 = pneg %p455
      // Predicated region
      $region9: #{tpu_custom_call.1} parent=5 // pred_check
        _
      $region10: #{tpu_custom_call.1} parent=5 // pred_check_branch
        %458 = sbr.rel (%p455) target = $region12
      $region11: #{tpu_custom_call.1} parent=5 // pred_region
        %s459 = ssub.s32 %s31, 1
        // Predicated region
        $region13: #{tpu_custom_call.1} parent=11 // pred_check
          %p460 = pneg %p104
        $region14: #{tpu_custom_call.1} parent=11 // pred_check_branch
          %462 = sbr.rel (%p460) target = $region16
        $region15: #{tpu_custom_call.1} parent=11 // pred_region
          _
        $region16: #{tpu_custom_call.1} parent=11 // pred_fallthru
          _
        // Predicated region
        $region17: #{tpu_custom_call.1} parent=11 // pred_check
          %p463 = pneg %p125
        $region18: #{tpu_custom_call.1} parent=11 // pred_check_branch
          %465 = sbr.rel (%p463) target = $region20
        $region19: #{tpu_custom_call.1} parent=11 // pred_region
          _
        $region20: #{tpu_custom_call.1} parent=11 // pred_fallthru
          _
        // Predicated region
        $region21: #{tpu_custom_call.1} parent=11 // pred_check
          %p466 = pneg %p146
        $region22: #{tpu_custom_call.1} parent=11 // pred_check_branch
          %468 = sbr.rel (%p466) target = $region24
        $region23: #{tpu_custom_call.1} parent=11 // pred_region
          _
        $region24: #{tpu_custom_call.1} parent=11 // pred_fallthru
          _
        // Predicated region
        $region25: #{tpu_custom_call.1} parent=11 // pred_check
          %p469 = pneg %p167
        $region26: #{tpu_custom_call.1} parent=11 // pred_check_branch
          %471 = sbr.rel (%p469) target = $region28
        $region27: #{tpu_custom_call.1} parent=11 // pred_region
          _
        $region28: #{tpu_custom_call.1} parent=11 // pred_fallthru
          _
        // Predicated region
        $region29: #{tpu_custom_call.1} parent=11 // pred_check
          %p472 = pneg %p188
        $region30: #{tpu_custom_call.1} parent=11 // pred_check_branch
          %474 = sbr.rel (%p472) target = $region32
        $region31: #{tpu_custom_call.1} parent=11 // pred_region
          _
        $region32: #{tpu_custom_call.1} parent=11 // pred_fallthru
          _
        // Predicated region
        $region33: #{tpu_custom_call.1} parent=11 // pred_check
          %p475 = pneg %p209
        $region34: #{tpu_custom_call.1} parent=11 // pred_check_branch
          %477 = sbr.rel (%p475) target = $region36
        $region35: #{tpu_custom_call.1} parent=11 // pred_region
          _
        $region36: #{tpu_custom_call.1} parent=11 // pred_fallthru
          _
        // Predicated region
        $region37: #{tpu_custom_call.1} parent=11 // pred_check
          %p478 = pneg %p230
        $region38: #{tpu_custom_call.1} parent=11 // pred_check_branch
          %480 = sbr.rel (%p478) target = $region40
        $region39: #{tpu_custom_call.1} parent=11 // pred_region
          _
        $region40: #{tpu_custom_call.1} parent=11 // pred_fallthru
          _
        // Predicated region
        $region41: #{tpu_custom_call.1} parent=11 // pred_check
          %p481 = pneg %p251
        $region42: #{tpu_custom_call.1} parent=11 // pred_check_branch
          %483 = sbr.rel (%p481) target = $region44
        $region43: #{tpu_custom_call.1} parent=11 // pred_region
          _
        $region44: #{tpu_custom_call.1} parent=11 // pred_fallthru
          _
        // Predicated region
        $region45: #{tpu_custom_call.1} parent=11 // pred_check
          %p484 = pneg %p272
        $region46: #{tpu_custom_call.1} parent=11 // pred_check_branch
          %486 = sbr.rel (%p484) target = $region48
        $region47: #{tpu_custom_call.1} parent=11 // pred_region
          _
        $region48: #{tpu_custom_call.1} parent=11 // pred_fallthru
          _
        // Predicated region
        $region49: #{tpu_custom_call.1} parent=11 // pred_check
          %p487 = pneg %p293
        $region50: #{tpu_custom_call.1} parent=11 // pred_check_branch
          %489 = sbr.rel (%p487) target = $region52
        $region51: #{tpu_custom_call.1} parent=11 // pred_region
          _
        $region52: #{tpu_custom_call.1} parent=11 // pred_fallthru
          _
        // Predicated region
        $region53: #{tpu_custom_call.1} parent=11 // pred_check
          %p490 = pneg %p314
        $region54: #{tpu_custom_call.1} parent=11 // pred_check_branch
          %492 = sbr.rel (%p490) target = $region56
        $region55: #{tpu_custom_call.1} parent=11 // pred_region
          %s494 = ssub.s32 256, 256
          %495 = vsyncadd [#allocation7], %s494
          %s496 = sshll.u32 [#allocation6], 4
          %s497 = int_to_ptr.vmem [resolvable:$true] %s496
          %502 = dma.hbm_to_vmem [thread:$0]  %s12, 256, %s497, [#allocation7], 64, 64, 4
        $region56: #{tpu_custom_call.1} parent=11 // pred_fallthru
          _
        // Predicated region
        $region57: #{tpu_custom_call.1} parent=11 // pred_check
          %p503 = pneg %p335
        $region58: #{tpu_custom_call.1} parent=11 // pred_check_branch
          %505 = sbr.rel (%p503) target = $region60
        $region59: #{tpu_custom_call.1} parent=11 // pred_region
          _
        $region60: #{tpu_custom_call.1} parent=11 // pred_fallthru
          _
        // Predicated region
        $region61: #{tpu_custom_call.1} parent=11 // pred_check
          %p506 = pneg %p356
        $region62: #{tpu_custom_call.1} parent=11 // pred_check_branch
          %508 = sbr.rel (%p506) target = $region64
        $region63: #{tpu_custom_call.1} parent=11 // pred_region
          _
        $region64: #{tpu_custom_call.1} parent=11 // pred_fallthru
          _
        // Predicated region
        $region65: #{tpu_custom_call.1} parent=11 // pred_check
          %p509 = pneg %p377
        $region66: #{tpu_custom_call.1} parent=11 // pred_check_branch
          %511 = sbr.rel (%p509) target = $region68
        $region67: #{tpu_custom_call.1} parent=11 // pred_region
          _
        $region68: #{tpu_custom_call.1} parent=11 // pred_fallthru
          _
        // Predicated region
        $region69: #{tpu_custom_call.1} parent=11 // pred_check
          %p512 = pneg %p398
        $region70: #{tpu_custom_call.1} parent=11 // pred_check_branch
          %514 = sbr.rel (%p512) target = $region72
        $region71: #{tpu_custom_call.1} parent=11 // pred_region
          _
        $region72: #{tpu_custom_call.1} parent=11 // pred_fallthru
          _
        // Predicated region
        $region73: #{tpu_custom_call.1} parent=11 // pred_check
          %p515 = pneg %p419
        $region74: #{tpu_custom_call.1} parent=11 // pred_check_branch
          %517 = sbr.rel (%p515) target = $region76
        $region75: #{tpu_custom_call.1} parent=11 // pred_region
          _
        $region76: #{tpu_custom_call.1} parent=11 // pred_fallthru
          _
      $region12: #{tpu_custom_call.1} parent=5 // pred_fallthru
        _
      %p518 = scmp.lt.s32.totalorder %s31, 2
      // Predicated region
      $region77: #{tpu_custom_call.1} parent=5 // pred_check
        %p519 = pneg %p518
      $region78: #{tpu_custom_call.1} parent=5 // pred_check_branch
        %521 = sbr.rel (%p519) target = $region80
      $region79: #{tpu_custom_call.1} parent=5 // pred_region
        // Predicated region
        $region81: #{tpu_custom_call.1} parent=79 // pred_check
          %p522 = pneg %p51
        $region82: #{tpu_custom_call.1} parent=79 // pred_check_branch
          %524 = sbr.rel (%p522) target = $region84
        $region83: #{tpu_custom_call.1} parent=79 // pred_region
          %p525 = scmp.lt.s32.totalorder %s31, 1
          %s526 = scalar_select %p525, %s31, 1
          %s527 = smul.addr %s526, 8
          %s528 = scalar_lea.vmem %s0, %s527
        $region84: #{tpu_custom_call.1} parent=79 // pred_fallthru
          _
        // Predicated region
        $region85: #{tpu_custom_call.1} parent=79 // pred_check
          %p529 = pneg %p77
        $region86: #{tpu_custom_call.1} parent=79 // pred_check_branch
          %531 = sbr.rel (%p529) target = $region88
        $region87: #{tpu_custom_call.1} parent=79 // pred_region
          %s532 = sand.u32 %s67, 1
          %s533 = scalar_lea.sflag [#allocation4], %s532
          %s534 = sand.u32 %s67, 1
          %s535 = scalar_lea.vmem [#allocation3], %s534
          %s537 = ssub.s32 16, 16
          %538 = vsyncadd %s533, %s537
          %s539 = smul.addr %s31, 16
          %s540 = scalar_lea.hbm %s1, %s539
          %s542 = sshll.u32 %s535, 4
          %s543 = int_to_ptr.vmem [resolvable:$true] %s542
          %545 = dma.hbm_to_vmem [thread:$0]  %s540, 16, %s543, %s533
        $region88: #{tpu_custom_call.1} parent=79 // pred_fallthru
          _
      $region80: #{tpu_custom_call.1} parent=5 // pred_fallthru
        _
      %p546 = scmp.le.s32.totalorder 1, %s31
      %p547 = scmp.lt.s32.totalorder %s31, 3
      %p548 = pnand %p546, %p547
      %p549 = pneg %p548
      // Predicated region
      $region89: #{tpu_custom_call.1} parent=5 // pred_check
        _
      $region90: #{tpu_custom_call.1} parent=5 // pred_check_branch
        %551 = sbr.rel (%p548) target = $region92
      $region91: #{tpu_custom_call.1} parent=5 // pred_region
        %s552 = ssub.s32 %s31, 1
        %s553 = sand.u32 %s70, 1
        %s554 = scalar_lea.sflag [#allocation4], %s553
        %s555 = sand.u32 %s70, 1
        %s556 = scalar_lea.vmem [#allocation3], %s555
        // Predicated region
        $region93: #{tpu_custom_call.1} parent=91 // pred_check
          %p557 = pneg %p83
        $region94: #{tpu_custom_call.1} parent=91 // pred_check_branch
          %559 = sbr.rel (%p557) target = $region96
        $region95: #{tpu_custom_call.1} parent=91 // pred_region
          %560 = dma.done %s554, 16
        $region96: #{tpu_custom_call.1} parent=91 // pred_fallthru
          _
        // Predicated region
        $region97: #{tpu_custom_call.1} parent=91 // pred_check
          %p561 = pneg %p314
        $region98: #{tpu_custom_call.1} parent=91 // pred_check_branch
          %563 = sbr.rel (%p561) target = $region100
        $region99: #{tpu_custom_call.1} parent=91 // pred_region
          %564 = dma.done [#allocation7], 256
        $region100: #{tpu_custom_call.1} parent=91 // pred_fallthru
          _
        %p565 = scmp.lt.s32.totalorder %s36, 1
        %s566 = scalar_select %p565, %s36, 1
        %s567 = smul.addr %s566, 8
        %s568 = scalar_lea.vmem %s0, %s567
        %p569 = pneg %p57
        %p570 = pneg %p54
        %s571 = sand.u32 %s70, 1
        %s572 = scalar_lea.sflag [#allocation4], %s571
        %s573 = sand.u32 %s70, 1
        %s574 = scalar_lea.vmem [#allocation3], %s573
        %p575 = pneg %p83
        %p576 = pneg %p80
        %p577 = pneg %p104
        %p578 = pneg %p101
        %p579 = pneg %p125
        %p580 = pneg %p122
        %p581 = pneg %p146
        %p582 = pneg %p143
        %p583 = pneg %p167
        %p584 = pneg %p164
        %p585 = pneg %p188
        %p586 = pneg %p185
        %p587 = pneg %p209
        %p588 = pneg %p206
        %p589 = pneg %p230
        %p590 = pneg %p227
        %p591 = pneg %p251
        %p592 = pneg %p248
        %p593 = pneg %p272
        %p594 = pneg %p269
        %p595 = pneg %p293
        %p596 = pneg %p290
        %p597 = pneg %p314
        %p598 = pneg %p311
        %p599 = pneg %p335
        %p600 = pneg %p332
        %p601 = pneg %p356
        %p602 = pneg %p353
        %p603 = pneg %p377
        %p604 = pneg %p374
        %p605 = pneg %p398
        %p606 = pneg %p395
        %p607 = pneg %p419
        %p608 = pneg %p416
        %p609 = pneg %p445
        %p610 = pneg %p442
        %s611 = sand.u32 %s432, 1
        %s612 = scalar_lea.sflag [#allocation5], %s611
        %s613 = sand.u32 %s432, 1
        %s614 = smul.addr %s613, 8
        %s615 = scalar_lea.vmem [#allocation8], %s614
        %p616 = scmp.lt.s32.totalorder %s36, 1
        %s617 = scalar_select %p616, %s36, 1
        %s618 = smul.addr %s617, 8
        %s619 = scalar_lea.vmem %s0, %s618
        %v621 = vld [vmem:[%s619] sm:$0xff]
        %v622 = vld [vmem:[%s556] sm:$0x1]
        %v623 = vpack.c.bf16 %v621, %v621
        %v624 = vld [vmem:[%s2] sm:$0xf]
        %v625 = vld [vmem:[%s2 + $0x4] sm:$0xf]
        %v626 = vld [vmem:[%s2 + $0x8] sm:$0xf]
        %v627 = vld [vmem:[%s2 + $0xc] sm:$0xf]
        %v628 = vld [vmem:[%s3] sm:$0x1]
        %v630 = vlaneseq
        %v631 = vshrl.u32 %v630, 7
        %v632 = vsub.s32 0, %v631
        %v633 = vrot.slane %v628, %v632
        %v639 = vunpack.c.l.b16 %v624
        %v640 = vunpack.c.l.b16 %v625
        %v641 = vunpack.c.l.b16 %v626
        %v642 = vunpack.c.l.b16 %v627
        %v643 = vpack.c.b16 %v640, %v639
        %v644 = vpack.c.b16 %v642, %v641
        %vm647 = vcmask 261120
        %v649 = vsel %vm647, %v623, 0
        %651 = vmatprep.subr.bf16.mxu0 0
        %652 = vmatpush1.bf16.msra.mxu0 0
        %653 = vmatprep.subr.bf16.mxu0 0
        %654 = vmatpush1.bf16.msra.mxu0 0
        %655 = vmatprep.subr.bf16.mxu0 0
        %656 = vmatpush1.bf16.msra.mxu0 0
        %657 = vmatprep.subr.bf16.mxu0 0
        %658 = vmatpush1.bf16.msra.mxu0 0
        %659 = vmatprep.subr.bf16.mxu0 0
        %660 = vmatpush1.bf16.msra.mxu0 0
        %661 = vmatprep.subr.bf16.mxu0 0
        %662 = vmatpush1.bf16.msra.mxu0 0
        %663 = vmatprep.subr.bf16.mxu0 0
        %664 = vmatpush1.bf16.msra.mxu0 %v644
        %665 = vmatprep.subr.bf16.mxu0 0
        %666 = vmatpush1.bf16.msra.mxu0 %v643
        %667 = vmatprep.subr.bf16.mxu0 0
        %668 = vmatpush2.bf16.msra.mxu0 0
        %669 = vmatprep.subr.bf16.mxu0 0
        %670 = vmatpush2.bf16.msra.mxu0 0
        %671 = vmatprep.subr.bf16.mxu0 0
        %672 = vmatpush2.bf16.msra.mxu0 0
        %673 = vmatprep.subr.bf16.mxu0 0
        %674 = vmatpush2.bf16.msra.mxu0 0
        %675 = vmatprep.subr.bf16.mxu0 0
        %676 = vmatpush2.bf16.msra.mxu0 0
        %677 = vmatprep.subr.bf16.mxu0 0
        %678 = vmatpush2.bf16.msra.mxu0 0
        %679 = vmatprep.subr.bf16.mxu0 0
        %680 = vmatpush2.bf16.msra.mxu0 0
        %681 = vmatprep.subr.bf16.mxu0 0
        %682 = vmatpush2.bf16.msra.mxu0 0
        %683 = vmatprep.mubr.bf16.mxu0 0
        %684 = vmatmul.mubr.bf16.gmra.mxu0 %v649
        %v685 = vpop.f32.mrf.mxu0
        %v686 = vadd.f32 %v633, %v685
        %v687 = vpop.f32.mrf.mxu0
        %v688 = vpop.f32.mrf.mxu0
        %v689 = vpop.f32.mrf.mxu0
        %690 = vdwg.mxu0
        %v691 = vld [vmem:[%s4] sm:$0xf]
        %v692 = vld [vmem:[%s4 + $0x4] sm:$0xf]
        %v693 = vld [vmem:[%s4 + $0x8] sm:$0xf]
        %v694 = vld [vmem:[%s4 + $0xc] sm:$0xf]
        %v695 = vld [vmem:[%s5] sm:$0x1]
        %v697 = vlaneseq
        %v698 = vshrl.u32 %v697, 7
        %v699 = vsub.s32 0, %v698
        %v700 = vrot.slane %v695, %v699
        %v706 = vunpack.c.l.b16 %v691
        %v707 = vunpack.c.l.b16 %v692
        %v708 = vunpack.c.l.b16 %v693
        %v709 = vunpack.c.l.b16 %v694
        %v710 = vpack.c.b16 %v707, %v706
        %v711 = vpack.c.b16 %v709, %v708
        %714 = vmatprep.subr.bf16.mxu0 0
        %715 = vmatpush1.bf16.msra.mxu0 0
        %716 = vmatprep.subr.bf16.mxu0 0
        %717 = vmatpush1.bf16.msra.mxu0 0
        %718 = vmatprep.subr.bf16.mxu0 0
        %719 = vmatpush1.bf16.msra.mxu0 0
        %720 = vmatprep.subr.bf16.mxu0 0
        %721 = vmatpush1.bf16.msra.mxu0 0
        %722 = vmatprep.subr.bf16.mxu0 0
        %723 = vmatpush1.bf16.msra.mxu0 0
        %724 = vmatprep.subr.bf16.mxu0 0
        %725 = vmatpush1.bf16.msra.mxu0 0
        %726 = vmatprep.subr.bf16.mxu0 0
        %727 = vmatpush1.bf16.msra.mxu0 %v711
        %728 = vmatprep.subr.bf16.mxu0 0
        %729 = vmatpush1.bf16.msra.mxu0 %v710
        %730 = vmatprep.subr.bf16.mxu0 0
        %731 = vmatpush2.bf16.msra.mxu0 0
        %732 = vmatprep.subr.bf16.mxu0 0
        %733 = vmatpush2.bf16.msra.mxu0 0
        %734 = vmatprep.subr.bf16.mxu0 0
        %735 = vmatpush2.bf16.msra.mxu0 0
        %736 = vmatprep.subr.bf16.mxu0 0
        %737 = vmatpush2.bf16.msra.mxu0 0
        %738 = vmatprep.subr.bf16.mxu0 0
        %739 = vmatpush2.bf16.msra.mxu0 0
        %740 = vmatprep.subr.bf16.mxu0 0
        %741 = vmatpush2.bf16.msra.mxu0 0
        %742 = vmatprep.subr.bf16.mxu0 0
        %743 = vmatpush2.bf16.msra.mxu0 0
        %744 = vmatprep.subr.bf16.mxu0 0
        %745 = vmatpush2.bf16.msra.mxu0 0
        %746 = vmatprep.mubr.bf16.mxu0 0
        %747 = vmatmul.mubr.bf16.gmra.mxu0 %v649
        %v748 = vpop.f32.mrf.mxu0
        %v749 = vadd.f32 %v700, %v748
        %v750 = vpop.f32.mrf.mxu0
        %v751 = vpop.f32.mrf.mxu0
        %v752 = vpop.f32.mrf.mxu0
        %753 = vdwg.mxu0
        %v754 = vld [vmem:[%s6] sm:$0xf]
        %v755 = vld [vmem:[%s6 + $0x4] sm:$0xf]
        %v756 = vld [vmem:[%s6 + $0x8] sm:$0xf]
        %v757 = vld [vmem:[%s6 + $0xc] sm:$0xf]
        %v758 = vld [vmem:[%s7] sm:$0x1]
        %v760 = vlaneseq
        %v761 = vshrl.u32 %v760, 7
        %v762 = vsub.s32 0, %v761
        %v763 = vrot.slane %v758, %v762
        %v769 = vunpack.c.l.b16 %v754
        %v770 = vunpack.c.l.b16 %v755
        %v771 = vunpack.c.l.b16 %v756
        %v772 = vunpack.c.l.b16 %v757
        %v773 = vpack.c.b16 %v770, %v769
        %v774 = vpack.c.b16 %v772, %v771
        %777 = vmatprep.subr.bf16.mxu0 0
        %778 = vmatpush1.bf16.msra.mxu0 0
        %779 = vmatprep.subr.bf16.mxu0 0
        %780 = vmatpush1.bf16.msra.mxu0 0
        %781 = vmatprep.subr.bf16.mxu0 0
        %782 = vmatpush1.bf16.msra.mxu0 0
        %783 = vmatprep.subr.bf16.mxu0 0
        %784 = vmatpush1.bf16.msra.mxu0 0
        %785 = vmatprep.subr.bf16.mxu0 0
        %786 = vmatpush1.bf16.msra.mxu0 0
        %787 = vmatprep.subr.bf16.mxu0 0
        %788 = vmatpush1.bf16.msra.mxu0 0
        %789 = vmatprep.subr.bf16.mxu0 0
        %790 = vmatpush1.bf16.msra.mxu0 %v774
        %791 = vmatprep.subr.bf16.mxu0 0
        %792 = vmatpush1.bf16.msra.mxu0 %v773
        %793 = vmatprep.subr.bf16.mxu0 0
        %794 = vmatpush2.bf16.msra.mxu0 0
        %795 = vmatprep.subr.bf16.mxu0 0
        %796 = vmatpush2.bf16.msra.mxu0 0
        %797 = vmatprep.subr.bf16.mxu0 0
        %798 = vmatpush2.bf16.msra.mxu0 0
        %799 = vmatprep.subr.bf16.mxu0 0
        %800 = vmatpush2.bf16.msra.mxu0 0
        %801 = vmatprep.subr.bf16.mxu0 0
        %802 = vmatpush2.bf16.msra.mxu0 0
        %803 = vmatprep.subr.bf16.mxu0 0
        %804 = vmatpush2.bf16.msra.mxu0 0
        %805 = vmatprep.subr.bf16.mxu0 0
        %806 = vmatpush2.bf16.msra.mxu0 0
        %807 = vmatprep.subr.bf16.mxu0 0
        %808 = vmatpush2.bf16.msra.mxu0 0
        %809 = vmatprep.mubr.bf16.mxu0 0
        %810 = vmatmul.mubr.bf16.gmra.mxu0 %v649
        %v811 = vpop.f32.mrf.mxu0
        %v812 = vadd.f32 %v763, %v811
        %v813 = vpop.f32.mrf.mxu0
        %v814 = vpop.f32.mrf.mxu0
        %v815 = vpop.f32.mrf.mxu0
        %816 = vdwg.mxu0
        %v817 = vpack.c.bf16 %v686, %v686
        %v818 = vpack.c.bf16 %v749, %v749
        %v819 = vpack.c.bf16 %v812, %v812
        %v820 = vlaneseq
        %v821 = vshrl.u32 %v820, 7
        %v822 = vlaneseq
        %v823 = vand.u32 %v822, 127
        %vm824 = vcmp.le.s32.totalorder %v823, %v821
        %vm825 = vcmp.gt.f32.partialorder %v622, 0.0
        %v826 = vsel %vm825, 1, 0
        %v827 = vlaneseq
        %v828 = vshrl.u32 %v827, 7
        %v829 = vsub.s32 0, %v828
        %v830 = vrot.slane %v826, %v829
        %vm831 = vcmp.eq.s32.totalorder %v830, 1
        %vm832 = vmand %vm824, %vm831
        %v833 = vsel %vm832, 0.0, -1e+30
        %vm834 = vcmask 64512
        %v836 = vsel %vm834, %v817, 0
        %v839 = vsel %vm834, %v818, 0
        %841 = vmatprep.subr.bf16.mxu0 0
        %842 = vmatpush1.bf16.xpose.msra.mxu0 0
        %843 = vmatprep.subr.bf16.mxu0 0
        %844 = vmatpush1.bf16.xpose.msra.mxu0 0
        %845 = vmatprep.subr.bf16.mxu0 0
        %846 = vmatpush1.bf16.xpose.msra.mxu0 0
        %847 = vmatprep.subr.bf16.mxu0 0
        %848 = vmatpush1.bf16.xpose.msra.mxu0 0
        %849 = vmatprep.subr.bf16.mxu0 0
        %850 = vmatpush1.bf16.xpose.msra.mxu0 0
        %851 = vmatprep.subr.bf16.mxu0 0
        %852 = vmatpush1.bf16.xpose.msra.mxu0 0
        %853 = vmatprep.subr.bf16.mxu0 0
        %854 = vmatpush1.bf16.xpose.msra.mxu0 0
        %855 = vmatprep.subr.bf16.mxu0 0
        %856 = vmatpush1.bf16.xpose.msra.mxu0 %v839
        %857 = vmatprep.subr.bf16.mxu0 0
        %858 = vmatpush2.bf16.xpose.msra.mxu0 0
        %859 = vmatprep.subr.bf16.mxu0 0
        %860 = vmatpush2.bf16.xpose.msra.mxu0 0
        %861 = vmatprep.subr.bf16.mxu0 0
        %862 = vmatpush2.bf16.xpose.msra.mxu0 0
        %863 = vmatprep.subr.bf16.mxu0 0
        %864 = vmatpush2.bf16.xpose.msra.mxu0 0
        %865 = vmatprep.subr.bf16.mxu0 0
        %866 = vmatpush2.bf16.xpose.msra.mxu0 0
        %867 = vmatprep.subr.bf16.mxu0 0
        %868 = vmatpush2.bf16.xpose.msra.mxu0 0
        %869 = vmatprep.subr.bf16.mxu0 0
        %870 = vmatpush2.bf16.xpose.msra.mxu0 0
        %871 = vmatprep.subr.bf16.mxu0 0
        %872 = vmatpush2.bf16.xpose.msra.mxu0 0
        %873 = vmatprep.mubr.bf16.mxu0 0
        %874 = vmatmul.mubr.bf16.gmra.mxu0 %v836
        %v875 = vpop.f32.mrf.mxu0
        %v876 = vadd.f32 0.0, %v875
        %v877 = vpop.f32.mrf.mxu0
        %v878 = vpop.f32.mrf.mxu0
        %v879 = vpop.f32.mrf.mxu0
        %880 = vdwg.mxu0
        %v881 = vmul.f32 %v876, 0.35355338
        %v882 = vadd.f32 %v881, %v833
        %v883 = vsel %vm834, %v882, -inf
        %884 = vmax.xlane.f32.xlu0 %v883
        %v885 = vpop.xlane.xlu0 %884
        %v886 = vsub.f32 %v882, %v885
        %v887 = vmul.f32 %v886, 1.442695
        %v888 = vpow.pop %v887
        %v889 = vsel %vm834, %v888, 0.0
        %890 = vadd.xlane.f32.xlu0 %v889
        %v891 = vpop.xlane.xlu0 %890
        %v892 = vrcp.pop %v891
        %v893 = vpack.c.bf16 %v888, %v888
        %v895 = vsel %vm834, %v893, 0
        %vm897 = vcmask 1043456
        %v899 = vsel %vm897, %v819, 0
        %901 = vmatprep.subr.bf16.mxu0 0
        %902 = vmatpush1.bf16.msra.mxu0 0
        %903 = vmatprep.subr.bf16.mxu0 0
        %904 = vmatpush1.bf16.msra.mxu0 0
        %905 = vmatprep.subr.bf16.mxu0 0
        %906 = vmatpush1.bf16.msra.mxu0 0
        %907 = vmatprep.subr.bf16.mxu0 0
        %908 = vmatpush1.bf16.msra.mxu0 0
        %909 = vmatprep.subr.bf16.mxu0 0
        %910 = vmatpush1.bf16.msra.mxu0 0
        %911 = vmatprep.subr.bf16.mxu0 0
        %912 = vmatpush1.bf16.msra.mxu0 0
        %913 = vmatprep.subr.bf16.mxu0 0
        %914 = vmatpush1.bf16.msra.mxu0 0
        %915 = vmatprep.subr.bf16.mxu0 0
        %916 = vmatpush1.bf16.msra.mxu0 %v899
        %917 = vmatprep.subr.bf16.mxu0 0
        %918 = vmatpush2.bf16.msra.mxu0 0
        %919 = vmatprep.subr.bf16.mxu0 0
        %920 = vmatpush2.bf16.msra.mxu0 0
        %921 = vmatprep.subr.bf16.mxu0 0
        %922 = vmatpush2.bf16.msra.mxu0 0
        %923 = vmatprep.subr.bf16.mxu0 0
        %924 = vmatpush2.bf16.msra.mxu0 0
        %925 = vmatprep.subr.bf16.mxu0 0
        %926 = vmatpush2.bf16.msra.mxu0 0
        %927 = vmatprep.subr.bf16.mxu0 0
        %928 = vmatpush2.bf16.msra.mxu0 0
        %929 = vmatprep.subr.bf16.mxu0 0
        %930 = vmatpush2.bf16.msra.mxu0 0
        %931 = vmatprep.subr.bf16.mxu0 0
        %932 = vmatpush2.bf16.msra.mxu0 0
        %933 = vmatprep.mubr.bf16.mxu0 0
        %934 = vmatmul.mubr.bf16.gmra.mxu0 %v895
        %v935 = vpop.f32.mrf.mxu0
        %v936 = vadd.f32 0.0, %v935
        %v937 = vpop.f32.mrf.mxu0
        %v938 = vpop.f32.mrf.mxu0
        %v939 = vpop.f32.mrf.mxu0
        %940 = vdwg.mxu0
        %v941 = vmul.f32 %v936, %v892
        %942 = vst.msk [vmem:[#allocation2] sm:$0xff] %vm834, %v941
        %944 = vrot.lane.b32.xlu0 %v817, 120
        %v945 = vpop.permute.xlu0 %944
        %947 = vrot.lane.b32.xlu0 %v818, 120
        %v948 = vpop.permute.xlu0 %947
        %v950 = vsel %vm834, %v945, 0
        %v953 = vsel %vm834, %v948, 0
        %955 = vmatprep.subr.bf16.mxu0 0
        %956 = vmatpush1.bf16.xpose.msra.mxu0 0
        %957 = vmatprep.subr.bf16.mxu0 0
        %958 = vmatpush1.bf16.xpose.msra.mxu0 0
        %959 = vmatprep.subr.bf16.mxu0 0
        %960 = vmatpush1.bf16.xpose.msra.mxu0 0
        %961 = vmatprep.subr.bf16.mxu0 0
        %962 = vmatpush1.bf16.xpose.msra.mxu0 0
        %963 = vmatprep.subr.bf16.mxu0 0
        %964 = vmatpush1.bf16.xpose.msra.mxu0 0
        %965 = vmatprep.subr.bf16.mxu0 0
        %966 = vmatpush1.bf16.xpose.msra.mxu0 0
        %967 = vmatprep.subr.bf16.mxu0 0
        %968 = vmatpush1.bf16.xpose.msra.mxu0 0
        %969 = vmatprep.subr.bf16.mxu0 0
        %970 = vmatpush1.bf16.xpose.msra.mxu0 %v953
        %971 = vmatprep.subr.bf16.mxu0 0
        %972 = vmatpush2.bf16.xpose.msra.mxu0 0
        %973 = vmatprep.subr.bf16.mxu0 0
        %974 = vmatpush2.bf16.xpose.msra.mxu0 0
        %975 = vmatprep.subr.bf16.mxu0 0
        %976 = vmatpush2.bf16.xpose.msra.mxu0 0
        %977 = vmatprep.subr.bf16.mxu0 0
        %978 = vmatpush2.bf16.xpose.msra.mxu0 0
        %979 = vmatprep.subr.bf16.mxu0 0
        %980 = vmatpush2.bf16.xpose.msra.mxu0 0
        %981 = vmatprep.subr.bf16.mxu0 0
        %982 = vmatpush2.bf16.xpose.msra.mxu0 0
        %983 = vmatprep.subr.bf16.mxu0 0
        %984 = vmatpush2.bf16.xpose.msra.mxu0 0
        %985 = vmatprep.subr.bf16.mxu0 0
        %986 = vmatpush2.bf16.xpose.msra.mxu0 0
        %987 = vmatprep.mubr.bf16.mxu0 0
        %988 = vmatmul.mubr.bf16.gmra.mxu0 %v950
        %v989 = vpop.f32.mrf.mxu0
        %v990 = vadd.f32 0.0, %v989
        %v991 = vpop.f32.mrf.mxu0
        %v992 = vpop.f32.mrf.mxu0
        %v993 = vpop.f32.mrf.mxu0
        %994 = vdwg.mxu0
        %v995 = vmul.f32 %v990, 0.35355338
        %v996 = vadd.f32 %v995, %v833
        %v997 = vsel %vm834, %v996, -inf
        %998 = vmax.xlane.f32.xlu0 %v997
        %v999 = vpop.xlane.xlu0 %998
        %v1000 = vsub.f32 %v996, %v999
        %v1001 = vmul.f32 %v1000, 1.442695
        %v1002 = vpow.pop %v1001
        %v1003 = vsel %vm834, %v1002, 0.0
        %1004 = vadd.xlane.f32.xlu0 %v1003
        %v1005 = vpop.xlane.xlu0 %1004
        %v1006 = vrcp.pop %v1005
        %v1007 = vpack.c.bf16 %v1002, %v1002
        %1009 = vrot.lane.b32.xlu0 %v819, 120
        %v1010 = vpop.permute.xlu0 %1009
        %v1012 = vsel %vm834, %v1007, 0
        %v1015 = vsel %vm897, %v1010, 0
        %1017 = vmatprep.subr.bf16.mxu0 0
        %1018 = vmatpush1.bf16.msra.mxu0 0
        %1019 = vmatprep.subr.bf16.mxu0 0
        %1020 = vmatpush1.bf16.msra.mxu0 0
        %1021 = vmatprep.subr.bf16.mxu0 0
        %1022 = vmatpush1.bf16.msra.mxu0 0
        %1023 = vmatprep.subr.bf16.mxu0 0
        %1024 = vmatpush1.bf16.msra.mxu0 0
        %1025 = vmatprep.subr.bf16.mxu0 0
        %1026 = vmatpush1.bf16.msra.mxu0 0
        %1027 = vmatprep.subr.bf16.mxu0 0
        %1028 = vmatpush1.bf16.msra.mxu0 0
        %1029 = vmatprep.subr.bf16.mxu0 0
        %1030 = vmatpush1.bf16.msra.mxu0 0
        %1031 = vmatprep.subr.bf16.mxu0 0
        %1032 = vmatpush1.bf16.msra.mxu0 %v1015
        %1033 = vmatprep.subr.bf16.mxu0 0
        %1034 = vmatpush2.bf16.msra.mxu0 0
        %1035 = vmatprep.subr.bf16.mxu0 0
        %1036 = vmatpush2.bf16.msra.mxu0 0
        %1037 = vmatprep.subr.bf16.mxu0 0
        %1038 = vmatpush2.bf16.msra.mxu0 0
        %1039 = vmatprep.subr.bf16.mxu0 0
        %1040 = vmatpush2.bf16.msra.mxu0 0
        %1041 = vmatprep.subr.bf16.mxu0 0
        %1042 = vmatpush2.bf16.msra.mxu0 0
        %1043 = vmatprep.subr.bf16.mxu0 0
        %1044 = vmatpush2.bf16.msra.mxu0 0
        %1045 = vmatprep.subr.bf16.mxu0 0
        %1046 = vmatpush2.bf16.msra.mxu0 0
        %1047 = vmatprep.subr.bf16.mxu0 0
        %1048 = vmatpush2.bf16.msra.mxu0 0
        %1049 = vmatprep.mubr.bf16.mxu0 0
        %1050 = vmatmul.mubr.bf16.gmra.mxu0 %v1012
        %v1051 = vpop.f32.mrf.mxu0
        %v1052 = vadd.f32 0.0, %v1051
        %v1053 = vpop.f32.mrf.mxu0
        %v1054 = vpop.f32.mrf.mxu0
        %v1055 = vpop.f32.mrf.mxu0
        %1056 = vdwg.mxu0
        %v1057 = vmul.f32 %v1052, %v1006
        %1059 = vrot.lane.b32.xlu0 %v1057, 8
        %v1060 = vpop.permute.xlu0 %1059
        %vm1062 = vcmask 130112
        %1063 = vst.msk [vmem:[#allocation2] sm:$0xff] %vm1062, %v1060
        %1064 = vrot.lane.b32.xlu0 %v817, 112
        %v1065 = vpop.permute.xlu0 %1064
        %1066 = vrot.lane.b32.xlu0 %v818, 112
        %v1067 = vpop.permute.xlu0 %1066
        %v1069 = vsel %vm834, %v1065, 0
        %v1072 = vsel %vm834, %v1067, 0
        %1074 = vmatprep.subr.bf16.mxu0 0
        %1075 = vmatpush1.bf16.xpose.msra.mxu0 0
        %1076 = vmatprep.subr.bf16.mxu0 0
        %1077 = vmatpush1.bf16.xpose.msra.mxu0 0
        %1078 = vmatprep.subr.bf16.mxu0 0
        %1079 = vmatpush1.bf16.xpose.msra.mxu0 0
        %1080 = vmatprep.subr.bf16.mxu0 0
        %1081 = vmatpush1.bf16.xpose.msra.mxu0 0
        %1082 = vmatprep.subr.bf16.mxu0 0
        %1083 = vmatpush1.bf16.xpose.msra.mxu0 0
        %1084 = vmatprep.subr.bf16.mxu0 0
        %1085 = vmatpush1.bf16.xpose.msra.mxu0 0
        %1086 = vmatprep.subr.bf16.mxu0 0
        %1087 = vmatpush1.bf16.xpose.msra.mxu0 0
        %1088 = vmatprep.subr.bf16.mxu0 0
        %1089 = vmatpush1.bf16.xpose.msra.mxu0 %v1072
        %1090 = vmatprep.subr.bf16.mxu0 0
        %1091 = vmatpush2.bf16.xpose.msra.mxu0 0
        %1092 = vmatprep.subr.bf16.mxu0 0
        %1093 = vmatpush2.bf16.xpose.msra.mxu0 0
        %1094 = vmatprep.subr.bf16.mxu0 0
        %1095 = vmatpush2.bf16.xpose.msra.mxu0 0
        %1096 = vmatprep.subr.bf16.mxu0 0
        %1097 = vmatpush2.bf16.xpose.msra.mxu0 0
        %1098 = vmatprep.subr.bf16.mxu0 0
        %1099 = vmatpush2.bf16.xpose.msra.mxu0 0
        %1100 = vmatprep.subr.bf16.mxu0 0
        %1101 = vmatpush2.bf16.xpose.msra.mxu0 0
        %1102 = vmatprep.subr.bf16.mxu0 0
        %1103 = vmatpush2.bf16.xpose.msra.mxu0 0
        %1104 = vmatprep.subr.bf16.mxu0 0
        %1105 = vmatpush2.bf16.xpose.msra.mxu0 0
        %1106 = vmatprep.mubr.bf16.mxu0 0
        %1107 = vmatmul.mubr.bf16.gmra.mxu0 %v1069
        %v1108 = vpop.f32.mrf.mxu0
        %v1109 = vadd.f32 0.0, %v1108
        %v1110 = vpop.f32.mrf.mxu0
        %v1111 = vpop.f32.mrf.mxu0
        %v1112 = vpop.f32.mrf.mxu0
        %1113 = vdwg.mxu0
        %v1114 = vmul.f32 %v1109, 0.35355338
        %v1115 = vadd.f32 %v1114, %v833
        %v1116 = vsel %vm834, %v1115, -inf
        %1117 = vmax.xlane.f32.xlu0 %v1116
        %v1118 = vpop.xlane.xlu0 %1117
        %v1119 = vsub.f32 %v1115, %v1118
        %v1120 = vmul.f32 %v1119, 1.442695
        %v1121 = vpow.pop %v1120
        %v1122 = vsel %vm834, %v1121, 0.0
        %1123 = vadd.xlane.f32.xlu0 %v1122
        %v1124 = vpop.xlane.xlu0 %1123
        %v1125 = vrcp.pop %v1124
        %v1126 = vpack.c.bf16 %v1121, %v1121
        %1127 = vrot.lane.b32.xlu0 %v819, 112
        %v1128 = vpop.permute.xlu0 %1127
        %v1130 = vsel %vm834, %v1126, 0
        %v1133 = vsel %vm897, %v1128, 0
        %1135 = vmatprep.subr.bf16.mxu0 0
        %1136 = vmatpush1.bf16.msra.mxu0 0
        %1137 = vmatprep.subr.bf16.mxu0 0
        %1138 = vmatpush1.bf16.msra.mxu0 0
        %1139 = vmatprep.subr.bf16.mxu0 0
        %1140 = vmatpush1.bf16.msra.mxu0 0
        %1141 = vmatprep.subr.bf16.mxu0 0
        %1142 = vmatpush1.bf16.msra.mxu0 0
        %1143 = vmatprep.subr.bf16.mxu0 0
        %1144 = vmatpush1.bf16.msra.mxu0 0
        %1145 = vmatprep.subr.bf16.mxu0 0
        %1146 = vmatpush1.bf16.msra.mxu0 0
        %1147 = vmatprep.subr.bf16.mxu0 0
        %1148 = vmatpush1.bf16.msra.mxu0 0
        %1149 = vmatprep.subr.bf16.mxu0 0
        %1150 = vmatpush1.bf16.msra.mxu0 %v1133
        %1151 = vmatprep.subr.bf16.mxu0 0
        %1152 = vmatpush2.bf16.msra.mxu0 0
        %1153 = vmatprep.subr.bf16.mxu0 0
        %1154 = vmatpush2.bf16.msra.mxu0 0
        %1155 = vmatprep.subr.bf16.mxu0 0
        %1156 = vmatpush2.bf16.msra.mxu0 0
        %1157 = vmatprep.subr.bf16.mxu0 0
        %1158 = vmatpush2.bf16.msra.mxu0 0
        %1159 = vmatprep.subr.bf16.mxu0 0
        %1160 = vmatpush2.bf16.msra.mxu0 0
        %1161 = vmatprep.subr.bf16.mxu0 0
        %1162 = vmatpush2.bf16.msra.mxu0 0
        %1163 = vmatprep.subr.bf16.mxu0 0
        %1164 = vmatpush2.bf16.msra.mxu0 0
        %1165 = vmatprep.subr.bf16.mxu0 0
        %1166 = vmatpush2.bf16.msra.mxu0 0
        %1167 = vmatprep.mubr.bf16.mxu0 0
        %1168 = vmatmul.mubr.bf16.gmra.mxu0 %v1130
        %v1169 = vpop.f32.mrf.mxu0
        %v1170 = vadd.f32 0.0, %v1169
        %v1171 = vpop.f32.mrf.mxu0
        %v1172 = vpop.f32.mrf.mxu0
        %v1173 = vpop.f32.mrf.mxu0
        %1174 = vdwg.mxu0
        %v1175 = vmul.f32 %v1170, %v1125
        %1177 = vrot.lane.b32.xlu0 %v1175, 16
        %v1178 = vpop.permute.xlu0 %1177
        %vm1180 = vcmask 195712
        %1181 = vst.msk [vmem:[#allocation2] sm:$0xff] %vm1180, %v1178
        %1182 = vrot.lane.b32.xlu0 %v817, 104
        %v1183 = vpop.permute.xlu0 %1182
        %1184 = vrot.lane.b32.xlu0 %v818, 104
        %v1185 = vpop.permute.xlu0 %1184
        %v1187 = vsel %vm834, %v1183, 0
        %v1190 = vsel %vm834, %v1185, 0
        %1192 = vmatprep.subr.bf16.mxu0 0
        %1193 = vmatpush1.bf16.xpose.msra.mxu0 0
        %1194 = vmatprep.subr.bf16.mxu0 0
        %1195 = vmatpush1.bf16.xpose.msra.mxu0 0
        %1196 = vmatprep.subr.bf16.mxu0 0
        %1197 = vmatpush1.bf16.xpose.msra.mxu0 0
        %1198 = vmatprep.subr.bf16.mxu0 0
        %1199 = vmatpush1.bf16.xpose.msra.mxu0 0
        %1200 = vmatprep.subr.bf16.mxu0 0
        %1201 = vmatpush1.bf16.xpose.msra.mxu0 0
        %1202 = vmatprep.subr.bf16.mxu0 0
        %1203 = vmatpush1.bf16.xpose.msra.mxu0 0
        %1204 = vmatprep.subr.bf16.mxu0 0
        %1205 = vmatpush1.bf16.xpose.msra.mxu0 0
        %1206 = vmatprep.subr.bf16.mxu0 0
        %1207 = vmatpush1.bf16.xpose.msra.mxu0 %v1190
        %1208 = vmatprep.subr.bf16.mxu0 0
        %1209 = vmatpush2.bf16.xpose.msra.mxu0 0
        %1210 = vmatprep.subr.bf16.mxu0 0
        %1211 = vmatpush2.bf16.xpose.msra.mxu0 0
        %1212 = vmatprep.subr.bf16.mxu0 0
        %1213 = vmatpush2.bf16.xpose.msra.mxu0 0
        %1214 = vmatprep.subr.bf16.mxu0 0
        %1215 = vmatpush2.bf16.xpose.msra.mxu0 0
        %1216 = vmatprep.subr.bf16.mxu0 0
        %1217 = vmatpush2.bf16.xpose.msra.mxu0 0
        %1218 = vmatprep.subr.bf16.mxu0 0
        %1219 = vmatpush2.bf16.xpose.msra.mxu0 0
        %1220 = vmatprep.subr.bf16.mxu0 0
        %1221 = vmatpush2.bf16.xpose.msra.mxu0 0
        %1222 = vmatprep.subr.bf16.mxu0 0
        %1223 = vmatpush2.bf16.xpose.msra.mxu0 0
        %1224 = vmatprep.mubr.bf16.mxu0 0
        %1225 = vmatmul.mubr.bf16.gmra.mxu0 %v1187
        %v1226 = vpop.f32.mrf.mxu0
        %v1227 = vadd.f32 0.0, %v1226
        %v1228 = vpop.f32.mrf.mxu0
        %v1229 = vpop.f32.mrf.mxu0
        %v1230 = vpop.f32.mrf.mxu0
        %1231 = vdwg.mxu0
        %v1232 = vmul.f32 %v1227, 0.35355338
        %v1233 = vadd.f32 %v1232, %v833
        %v1234 = vsel %vm834, %v1233, -inf
        %1235 = vmax.xlane.f32.xlu0 %v1234
        %v1236 = vpop.xlane.xlu0 %1235
        %v1237 = vsub.f32 %v1233, %v1236
        %v1238 = vmul.f32 %v1237, 1.442695
        %v1239 = vpow.pop %v1238
        %v1240 = vsel %vm834, %v1239, 0.0
        %1241 = vadd.xlane.f32.xlu0 %v1240
        %v1242 = vpop.xlane.xlu0 %1241
        %v1243 = vrcp.pop %v1242
        %v1244 = vpack.c.bf16 %v1239, %v1239
        %1245 = vrot.lane.b32.xlu0 %v819, 104
        %v1246 = vpop.permute.xlu0 %1245
        %v1248 = vsel %vm834, %v1244, 0
        %v1251 = vsel %vm897, %v1246, 0
        %1253 = vmatprep.subr.bf16.mxu0 0
        %1254 = vmatpush1.bf16.msra.mxu0 0
        %1255 = vmatprep.subr.bf16.mxu0 0
        %1256 = vmatpush1.bf16.msra.mxu0 0
        %1257 = vmatprep.subr.bf16.mxu0 0
        %1258 = vmatpush1.bf16.msra.mxu0 0
        %1259 = vmatprep.subr.bf16.mxu0 0
        %1260 = vmatpush1.bf16.msra.mxu0 0
        %1261 = vmatprep.subr.bf16.mxu0 0
        %1262 = vmatpush1.bf16.msra.mxu0 0
        %1263 = vmatprep.subr.bf16.mxu0 0
        %1264 = vmatpush1.bf16.msra.mxu0 0
        %1265 = vmatprep.subr.bf16.mxu0 0
        %1266 = vmatpush1.bf16.msra.mxu0 0
        %1267 = vmatprep.subr.bf16.mxu0 0
        %1268 = vmatpush1.bf16.msra.mxu0 %v1251
        %1269 = vmatprep.subr.bf16.mxu0 0
        %1270 = vmatpush2.bf16.msra.mxu0 0
        %1271 = vmatprep.subr.bf16.mxu0 0
        %1272 = vmatpush2.bf16.msra.mxu0 0
        %1273 = vmatprep.subr.bf16.mxu0 0
        %1274 = vmatpush2.bf16.msra.mxu0 0
        %1275 = vmatprep.subr.bf16.mxu0 0
        %1276 = vmatpush2.bf16.msra.mxu0 0
        %1277 = vmatprep.subr.bf16.mxu0 0
        %1278 = vmatpush2.bf16.msra.mxu0 0
        %1279 = vmatprep.subr.bf16.mxu0 0
        %1280 = vmatpush2.bf16.msra.mxu0 0
        %1281 = vmatprep.subr.bf16.mxu0 0
        %1282 = vmatpush2.bf16.msra.mxu0 0
        %1283 = vmatprep.subr.bf16.mxu0 0
        %1284 = vmatpush2.bf16.msra.mxu0 0
        %1285 = vmatprep.mubr.bf16.mxu0 0
        %1286 = vmatmul.mubr.bf16.gmra.mxu0 %v1248
        %v1287 = vpop.f32.mrf.mxu0
        %v1288 = vadd.f32 0.0, %v1287
        %v1289 = vpop.f32.mrf.mxu0
        %v1290 = vpop.f32.mrf.mxu0
        %v1291 = vpop.f32.mrf.mxu0
        %1292 = vdwg.mxu0
        %v1293 = vmul.f32 %v1288, %v1243
        %1295 = vrot.lane.b32.xlu0 %v1293, 24
        %v1296 = vpop.permute.xlu0 %1295
        %vm1298 = vcmask 261312
        %1299 = vst.msk [vmem:[#allocation2] sm:$0xff] %vm1298, %v1296
        %v1300 = vld [vmem:[#allocation2] sm:$0xff]
        %v1301 = vpack.c.bf16 %v1300, %v1300
        %v1302 = vld [vmem:[%s8] sm:$0xf]
        %v1303 = vld [vmem:[%s8 + $0x4] sm:$0xf]
        %v1304 = vld [vmem:[%s8 + $0x8] sm:$0xf]
        %v1305 = vld [vmem:[%s8 + $0xc] sm:$0xf]
        %v1306 = vld [vmem:[%s9] sm:$0x1]
        %v1308 = vlaneseq
        %v1309 = vshrl.u32 %v1308, 7
        %v1310 = vsub.s32 0, %v1309
        %v1311 = vrot.slane %v1306, %v1310
        %v1317 = vunpack.c.l.b16 %v1302
        %v1318 = vunpack.c.l.b16 %v1303
        %v1319 = vunpack.c.l.b16 %v1304
        %v1320 = vunpack.c.l.b16 %v1305
        %v1321 = vpack.c.b16 %v1318, %v1317
        %v1322 = vpack.c.b16 %v1320, %v1319
        %v1326 = vsel %vm647, %v1301, 0
        %1328 = vmatprep.subr.bf16.mxu0 0
        %1329 = vmatpush1.bf16.msra.mxu0 0
        %1330 = vmatprep.subr.bf16.mxu0 0
        %1331 = vmatpush1.bf16.msra.mxu0 0
        %1332 = vmatprep.subr.bf16.mxu0 0
        %1333 = vmatpush1.bf16.msra.mxu0 0
        %1334 = vmatprep.subr.bf16.mxu0 0
        %1335 = vmatpush1.bf16.msra.mxu0 0
        %1336 = vmatprep.subr.bf16.mxu0 0
        %1337 = vmatpush1.bf16.msra.mxu0 0
        %1338 = vmatprep.subr.bf16.mxu0 0
        %1339 = vmatpush1.bf16.msra.mxu0 0
        %1340 = vmatprep.subr.bf16.mxu0 0
        %1341 = vmatpush1.bf16.msra.mxu0 %v1322
        %1342 = vmatprep.subr.bf16.mxu0 0
        %1343 = vmatpush1.bf16.msra.mxu0 %v1321
        %1344 = vmatprep.subr.bf16.mxu0 0
        %1345 = vmatpush2.bf16.msra.mxu0 0
        %1346 = vmatprep.subr.bf16.mxu0 0
        %1347 = vmatpush2.bf16.msra.mxu0 0
        %1348 = vmatprep.subr.bf16.mxu0 0
        %1349 = vmatpush2.bf16.msra.mxu0 0
        %1350 = vmatprep.subr.bf16.mxu0 0
        %1351 = vmatpush2.bf16.msra.mxu0 0
        %1352 = vmatprep.subr.bf16.mxu0 0
        %1353 = vmatpush2.bf16.msra.mxu0 0
        %1354 = vmatprep.subr.bf16.mxu0 0
        %1355 = vmatpush2.bf16.msra.mxu0 0
        %1356 = vmatprep.subr.bf16.mxu0 0
        %1357 = vmatpush2.bf16.msra.mxu0 0
        %1358 = vmatprep.subr.bf16.mxu0 0
        %1359 = vmatpush2.bf16.msra.mxu0 0
        %1360 = vmatprep.mubr.bf16.mxu0 0
        %1361 = vmatmul.mubr.bf16.gmra.mxu0 %v1326
        %v1362 = vpop.f32.mrf.mxu0
        %v1363 = vadd.f32 %v1311, %v1362
        %v1364 = vpop.f32.mrf.mxu0
        %v1365 = vpop.f32.mrf.mxu0
        %v1366 = vpop.f32.mrf.mxu0
        %1367 = vdwg.mxu0
        %v1368 = vadd.f32 %v621, %v1363
        %v1369 = vld [vmem:[%s10] sm:$0x1]
        %v1370 = vld [vmem:[%s11] sm:$0x1]
        %v1371 = vsel %vm647, %v1368, 0.0
        %1372 = vadd.xlane.f32.xlu0 %v1371
        %v1373 = vpop.xlane.xlu0 %1372
        %v1374 = vrcp.pop 32.0
        %v1375 = vmul.f32 %v1373, %v1374
        %v1376 = vsub.f32 %v1368, %v1375
        %v1377 = vmul.f32 %v1376, %v1376
        %v1378 = vsel %vm647, %v1377, 0.0
        %1379 = vadd.xlane.f32.xlu0 %v1378
        %v1380 = vpop.xlane.xlu0 %1379
        %v1381 = vmul.f32 %v1380, %v1374
        %v1382 = vadd.f32 %v1381, 1e-05
        %v1383 = vrsqrt.pop %v1382
        %v1384 = vmul.f32 %v1376, %v1383
        %v1386 = vlaneseq
        %v1387 = vshrl.u32 %v1386, 7
        %v1388 = vsub.s32 0, %v1387
        %v1389 = vrot.slane %v1369, %v1388
        %v1391 = vmul.f32 %v1384, %v1389
        %v1393 = vlaneseq
        %v1394 = vshrl.u32 %v1393, 7
        %v1395 = vsub.s32 0, %v1394
        %v1396 = vrot.slane %v1370, %v1395
        %v1398 = vadd.f32 %v1391, %v1396
        %v1399 = vpack.c.bf16 %v1398, %v1398
        %v1400 = vld [vmem:[#allocation6] sm:$0xf]
        %v1401 = vld [vmem:[#allocation6 + $0x4] sm:$0xf]
        %v1402 = vld [vmem:[#allocation6 + $0x8] sm:$0xf]
        %v1403 = vld [vmem:[#allocation6 + $0xc] sm:$0xf]
        %v1404 = vld [vmem:[%s13] sm:$0x1]
        %v1406 = vlaneseq
        %v1407 = vshrl.u32 %v1406, 7
        %v1408 = vsub.s32 0, %v1407
        %v1409 = vrot.slane %v1404, %v1408
        %v1415 = vunpack.c.l.b16 %v1400
        %v1416 = vunpack.c.l.b16 %v1401
        %v1417 = vunpack.c.l.b16 %v1402
        %v1418 = vunpack.c.l.b16 %v1403
        %v1419 = vpack.c.b16 %v1416, %v1415
        %v1420 = vpack.c.b16 %v1418, %v1417
        %v1424 = vsel %vm647, %v1399, 0
        %1426 = vmatprep.subr.bf16.mxu0 0
        %1427 = vmatpush1.bf16.msra.mxu0 0
        %1428 = vmatprep.subr.bf16.mxu0 0
        %1429 = vmatpush1.bf16.msra.mxu0 0
        %1430 = vmatprep.subr.bf16.mxu0 0
        %1431 = vmatpush1.bf16.msra.mxu0 0
        %1432 = vmatprep.subr.bf16.mxu0 0
        %1433 = vmatpush1.bf16.msra.mxu0 0
        %1434 = vmatprep.subr.bf16.mxu0 0
        %1435 = vmatpush1.bf16.msra.mxu0 0
        %1436 = vmatprep.subr.bf16.mxu0 0
        %1437 = vmatpush1.bf16.msra.mxu0 0
        %1438 = vmatprep.subr.bf16.mxu0 0
        %1439 = vmatpush1.bf16.msra.mxu0 %v1420
        %1440 = vmatprep.subr.bf16.mxu0 0
        %1441 = vmatpush1.bf16.msra.mxu0 %v1419
        %1442 = vmatprep.subr.bf16.mxu0 0
        %1443 = vmatpush2.bf16.msra.mxu0 0
        %1444 = vmatprep.subr.bf16.mxu0 0
        %1445 = vmatpush2.bf16.msra.mxu0 0
        %1446 = vmatprep.subr.bf16.mxu0 0
        %1447 = vmatpush2.bf16.msra.mxu0 0
        %1448 = vmatprep.subr.bf16.mxu0 0
        %1449 = vmatpush2.bf16.msra.mxu0 0
        %1450 = vmatprep.subr.bf16.mxu0 0
        %1451 = vmatpush2.bf16.msra.mxu0 0
        %1452 = vmatprep.subr.bf16.mxu0 0
        %1453 = vmatpush2.bf16.msra.mxu0 0
        %1454 = vmatprep.subr.bf16.mxu0 0
        %1455 = vmatpush2.bf16.msra.mxu0 0
        %1456 = vmatprep.subr.bf16.mxu0 0
        %1457 = vmatpush2.bf16.msra.mxu0 0
        %1458 = vmatprep.mubr.bf16.mxu0 0
        %1459 = vmatmul.mubr.bf16.gmra.mxu0 %v1424
        %v1460 = vpop.f32.mrf.mxu0
        %v1461 = vadd.f32 %v1409, %v1460
        %v1462 = vpop.f32.mrf.mxu0
        %v1463 = vpop.f32.mrf.mxu0
        %v1464 = vpop.f32.mrf.mxu0
        %1465 = vdwg.mxu0
        %v1466 = vmul.f32 %v1461, %v1461
        %v1467 = vmul.f32 %v1461, %v1466
        %v1468 = vmul.f32 %v1467, 0.044715
        %v1469 = vadd.f32 %v1461, %v1468
        %v1470 = vmul.f32 %v1469, 0.7978846
        %v1471 = vtanh.pop %v1470
        %v1472 = vadd.f32 %v1471, 1.0
        %v1473 = vmul.f32 %v1472, 0.5
        %v1474 = vmul.f32 %v1461, %v1473
        %v1475 = vpack.c.bf16 %v1474, %v1474
        %v1476 = vld [vmem:[%s14] sm:$0xf]
        %v1477 = vld [vmem:[%s14 + $0x4] sm:$0xf]
        %v1478 = vld [vmem:[%s14 + $0x8] sm:$0xf]
        %v1479 = vld [vmem:[%s14 + $0xc] sm:$0xf]
        %v1480 = vld [vmem:[%s14 + $0x10] sm:$0xf]
        %v1481 = vld [vmem:[%s14 + $0x14] sm:$0xf]
        %v1482 = vld [vmem:[%s14 + $0x18] sm:$0xf]
        %v1483 = vld [vmem:[%s14 + $0x1c] sm:$0xf]
        %v1484 = vld [vmem:[%s14 + $0x20] sm:$0xf]
        %v1485 = vld [vmem:[%s14 + $0x24] sm:$0xf]
        %v1486 = vld [vmem:[%s14 + $0x28] sm:$0xf]
        %v1487 = vld [vmem:[%s14 + $0x2c] sm:$0xf]
        %v1488 = vld [vmem:[%s14 + $0x30] sm:$0xf]
        %v1489 = vld [vmem:[%s14 + $0x34] sm:$0xf]
        %v1490 = vld [vmem:[%s14 + $0x38] sm:$0xf]
        %v1491 = vld [vmem:[%s14 + $0x3c] sm:$0xf]
        %v1492 = vld [vmem:[%s15] sm:$0x1]
        %v1494 = vlaneseq
        %v1495 = vshrl.u32 %v1494, 7
        %v1496 = vsub.s32 0, %v1495
        %v1497 = vrot.slane %v1492, %v1496
        %v1515 = vunpack.c.l.b16 %v1476
        %v1516 = vunpack.c.l.b16 %v1477
        %v1517 = vunpack.c.l.b16 %v1478
        %v1518 = vunpack.c.l.b16 %v1479
        %v1519 = vunpack.c.l.b16 %v1480
        %v1520 = vunpack.c.l.b16 %v1481
        %v1521 = vunpack.c.l.b16 %v1482
        %v1522 = vunpack.c.l.b16 %v1483
        %v1523 = vunpack.c.l.b16 %v1484
        %v1524 = vunpack.c.l.b16 %v1485
        %v1525 = vunpack.c.l.b16 %v1486
        %v1526 = vunpack.c.l.b16 %v1487
        %v1527 = vunpack.c.l.b16 %v1488
        %v1528 = vunpack.c.l.b16 %v1489
        %v1529 = vunpack.c.l.b16 %v1490
        %v1530 = vunpack.c.l.b16 %v1491
        %v1531 = vpack.c.b16 %v1516, %v1515
        %v1532 = vpack.c.b16 %v1518, %v1517
        %v1533 = vpack.c.b16 %v1520, %v1519
        %v1534 = vpack.c.b16 %v1522, %v1521
        %v1535 = vpack.c.b16 %v1524, %v1523
        %v1536 = vpack.c.b16 %v1526, %v1525
        %v1537 = vpack.c.b16 %v1528, %v1527
        %v1538 = vpack.c.b16 %v1530, %v1529
        %1547 = vmatprep.subr.bf16.mxu0 0
        %1548 = vmatpush1.bf16.msra.mxu0 %v1538
        %1549 = vmatprep.subr.bf16.mxu0 0
        %1550 = vmatpush1.bf16.msra.mxu0 %v1537
        %1551 = vmatprep.subr.bf16.mxu0 0
        %1552 = vmatpush1.bf16.msra.mxu0 %v1536
        %1553 = vmatprep.subr.bf16.mxu0 0
        %1554 = vmatpush1.bf16.msra.mxu0 %v1535
        %1555 = vmatprep.subr.bf16.mxu0 0
        %1556 = vmatpush1.bf16.msra.mxu0 %v1534
        %1557 = vmatprep.subr.bf16.mxu0 0
        %1558 = vmatpush1.bf16.msra.mxu0 %v1533
        %1559 = vmatprep.subr.bf16.mxu0 0
        %1560 = vmatpush1.bf16.msra.mxu0 %v1532
        %1561 = vmatprep.subr.bf16.mxu0 0
        %1562 = vmatpush1.bf16.msra.mxu0 %v1531
        %1563 = vmatprep.subr.bf16.mxu0 0
        %1564 = vmatpush2.bf16.msra.mxu0 0
        %1565 = vmatprep.subr.bf16.mxu0 0
        %1566 = vmatpush2.bf16.msra.mxu0 0
        %1567 = vmatprep.subr.bf16.mxu0 0
        %1568 = vmatpush2.bf16.msra.mxu0 0
        %1569 = vmatprep.subr.bf16.mxu0 0
        %1570 = vmatpush2.bf16.msra.mxu0 0
        %1571 = vmatprep.subr.bf16.mxu0 0
        %1572 = vmatpush2.bf16.msra.mxu0 0
        %1573 = vmatprep.subr.bf16.mxu0 0
        %1574 = vmatpush2.bf16.msra.mxu0 0
        %1575 = vmatprep.subr.bf16.mxu0 0
        %1576 = vmatpush2.bf16.msra.mxu0 0
        %1577 = vmatprep.subr.bf16.mxu0 0
        %1578 = vmatpush2.bf16.msra.mxu0 0
        %1579 = vmatprep.mubr.bf16.mxu0 0
        %1580 = vmatmul.mubr.bf16.gmra.mxu0 %v1475
        %v1581 = vpop.f32.mrf.mxu0
        %v1582 = vadd.f32 %v1497, %v1581
        %v1583 = vpop.f32.mrf.mxu0
        %v1584 = vpop.f32.mrf.mxu0
        %v1585 = vpop.f32.mrf.mxu0
        %1586 = vdwg.mxu0
        %v1587 = vadd.f32 %v1398, %v1582
        %v1588 = vld [vmem:[%s16] sm:$0x1]
        %v1589 = vld [vmem:[%s17] sm:$0x1]
        %v1590 = vsel %vm647, %v1587, 0.0
        %1591 = vadd.xlane.f32.xlu0 %v1590
        %v1592 = vpop.xlane.xlu0 %1591
        %v1593 = vmul.f32 %v1592, %v1374
        %v1594 = vsub.f32 %v1587, %v1593
        %v1595 = vmul.f32 %v1594, %v1594
        %v1596 = vsel %vm647, %v1595, 0.0
        %1597 = vadd.xlane.f32.xlu0 %v1596
        %v1598 = vpop.xlane.xlu0 %1597
        %v1599 = vmul.f32 %v1598, %v1374
        %v1600 = vadd.f32 %v1599, 1e-05
        %v1601 = vrsqrt.pop %v1600
        %v1602 = vmul.f32 %v1594, %v1601
        %v1604 = vlaneseq
        %v1605 = vshrl.u32 %v1604, 7
        %v1606 = vsub.s32 0, %v1605
        %v1607 = vrot.slane %v1588, %v1606
        %v1609 = vmul.f32 %v1602, %v1607
        %v1611 = vlaneseq
        %v1612 = vshrl.u32 %v1611, 7
        %v1613 = vsub.s32 0, %v1612
        %v1614 = vrot.slane %v1589, %v1613
        %v1616 = vadd.f32 %v1609, %v1614
        %1617 = vst.msk [vmem:[%s615] sm:$0xff] %vm647, %v1616
        %s1618 = sand.u32 %s432, 1
        %s1619 = scalar_lea.sflag [#allocation5], %s1618
        %s1620 = sand.u32 %s432, 1
        %s1621 = smul.addr %s1620, 8
        %s1622 = scalar_lea.vmem [#allocation8], %s1621
        // Predicated region
        $region101: #{tpu_custom_call.1} parent=91 // pred_check
          %p1623 = pneg %p442
        $region102: #{tpu_custom_call.1} parent=91 // pred_check_branch
          %1625 = sbr.rel (%p1623) target = $region104
        $region103: #{tpu_custom_call.1} parent=91 // pred_region
          %s1627 = ssub.s32 128, 128
          %1628 = vsyncadd %s1619, %s1627
          %s1629 = smul.addr %s36, 128
          %s1630 = scalar_lea.hbm %s18, %s1629
          %s1632 = sshll.u32 %s1622, 4
          %s1633 = int_to_ptr.vmem [resolvable:$true] %s1632
          %1635 = dma.vmem_to_hbm [thread:$0]  %s1633, 128, %s1630, %s1619
        $region104: #{tpu_custom_call.1} parent=91 // pred_fallthru
          _
      $region92: #{tpu_custom_call.1} parent=5 // pred_fallthru
        _
      %p1636 = scmp.le.s32.totalorder 2, %s31
      // Predicated region
      $region105: #{tpu_custom_call.1} parent=5 // pred_check
        %p1637 = pneg %p1636
      $region106: #{tpu_custom_call.1} parent=5 // pred_check_branch
        %1639 = sbr.rel (%p1637) target = $region108
      $region107: #{tpu_custom_call.1} parent=5 // pred_region
        %s1640 = ssub.s32 %s31, 2
        // Predicated region
        $region109: #{tpu_custom_call.1} parent=107 // pred_check
          %p1641 = pneg %p448
        $region110: #{tpu_custom_call.1} parent=107 // pred_check_branch
          %1643 = sbr.rel (%p1641) target = $region112
        $region111: #{tpu_custom_call.1} parent=107 // pred_region
          %s1644 = sand.u32 %s433, 1
          %s1645 = scalar_lea.sflag [#allocation5], %s1644
          %s1646 = sand.u32 %s433, 1
          %s1647 = smul.addr %s1646, 8
          %s1648 = scalar_lea.vmem [#allocation8], %s1647
          %1649 = dma.done %s1645, 128
        $region112: #{tpu_custom_call.1} parent=107 // pred_fallthru
          _
      $region108: #{tpu_custom_call.1} parent=5 // pred_fallthru
        _
    $region6: #{tpu_custom_call.1} parent=1 // loop_footer
      %s35 = sadd.s32 1, %s31
    $region7: #{tpu_custom_call.1} parent=1 // loop_footer_branch
      %30 = sbr.rel target = $region3
    $region8: #{tpu_custom_call.1} parent=1 // loop_exit
      _
    %1650 = vsyncpa [#allocation4], 1
    %s1651 = scalar_lea.sflag [#allocation4], 1
    %1652 = vsyncpa %s1651, 1
    %1653 = vsyncpa [#allocation7], 1
    %1654 = vsyncpa [#allocation5], 1
    %s1655 = scalar_lea.sflag [#allocation5], 1
    %1656 = vsyncpa %s1655, 1

</llo_original>
